<compile_context>
chip_gen: v7x
topology: tpu7x:2x2x1
jax: 0.10.0
libtpu: 0.0.40
codegen_flags: <defaults>
</compile_context>

<pallas_src>
import functools

import jax
import jax.numpy as jnp
from jax.experimental import pallas as pl
from jax.experimental.pallas import tpu as pltpu


def _ceil_div(a, b):
    return -(-a // b)


def _gated_mlp_kernel(gate_ids_ref, x_ref, w1_ref, b1_ref, w2_ref, b2_ref,
                      w3_ref, out_ref, *, SG, GMD, GMD_SHIFT):
    # ---- L1 (fused straight | gated) + bias + relu ---------------------------
    # x arrives as f32; cast to bf16 here (VPU cast hides under MXU/DMA) instead
    # of a separate wrapper-side HBM cast pass.
    x = x_ref[...].astype(jnp.bfloat16)                              # (TN, in)
    h1 = jnp.dot(x, w1_ref[...], preferred_element_type=jnp.float32)
    h1 = jnp.maximum(h1 + b1_ref[...], 0.0)                          # (TN, H1) f32

    # ---- gate mask ------------------------------------------------------------
    # (1, H1) iota only; group index via a plain shift (col >= 0, GM*D pow2).
    # Straight columns: group < SG.  Gated columns: group == gid + SG.
    gid = gate_ids_ref[...]                                          # (TN, 1) int32
    col = jax.lax.broadcasted_iota(jnp.int32, (1, h1.shape[1]), 1)   # (1, H1)
    if GMD_SHIFT is not None:
        grp = col >> GMD_SHIFT
    else:
        grp = col // GMD                                             # col >= 0
    keep = (grp < SG) | (grp == gid + SG)                            # (TN, H1) bool
    # TODO(synk): torch's `assert max(gate_ids) < G` is a host-side check; here
    # out-of-range gate ids silently mask all gated columns to zero.

    # Cast before the select (select is value-exact) so it runs on packed bf16
    # vregs on bf16-capable VPUs (v6e/v7x); still correct on v5e.
    h1 = jnp.where(keep, h1.astype(jnp.bfloat16), 0.0)               # (TN, H1) bf16

    # ---- L2 on cat([straight, gated_sum]) folded into one matmul --------------
    # w2_fused = [w2_straight ; tile(w2_gated, G)] -> MXU performs the gate sum.
    h2 = jnp.dot(h1, w2_ref[...], preferred_element_type=jnp.float32)
    h2 = jnp.maximum(h2 + b2_ref[...], 0.0)                          # (TN, D) f32

    # ---- L3 (no bias), unpadded lane store ------------------------------------
    out_ref[...] = jnp.dot(h2.astype(jnp.bfloat16), w3_ref[...],
                           preferred_element_type=jnp.float32).astype(out_ref.dtype)


def prepare_gated_mlp_params(params, *, D, G, SM=2, GM=1):
    """One-time weight fusion (hoisted out of the per-call path).

    Relies on w1g's columns being gate-major contiguous blocks of GM*D (gate g
    owns columns [g*GM*D, (g+1)*GM*D)), matching nn.Linear(input_dim, G*GM*D).
    """
    S, GMD = SM * D, GM * D
    assert params["w1s"].shape[1] == S
    assert params["w1g"].shape[1] == G * GMD          # gate-major blocks of GM*D
    assert params["w2"].shape[0] == S + GMD
    w1 = jnp.concatenate([params["w1s"], params["w1g"]], axis=1).astype(jnp.bfloat16)
    b1 = jnp.concatenate([params["b1s"], params["b1g"]], axis=1).astype(jnp.float32)
    # Fold the gate reduction into L2: [w2_straight ; tile(w2_gated, G)].
    w2 = jnp.concatenate([params["w2"][:S], jnp.tile(params["w2"][S:], (G, 1))],
                         axis=0).astype(jnp.bfloat16)                # (S + G*GMD, D)
    b2 = params["b2"].astype(jnp.float32)                            # (1, D)
    w3 = params["w3"].astype(jnp.bfloat16)                           # (D, out)
    return {"w1": w1, "b1": b1, "w2": w2, "b2": b2, "w3": w3}


def _choose_row_tile(N, block_rows):
    """Row tile: multiple of 8, >=2 grid steps when possible (v7x has two
    TensorCores sharded over the 'parallel' axis), rebalanced so the last step
    is not mostly padding, nudged to an even step count."""
    TN = max(8, min(block_rows, _ceil_div(N, 8) * 8))
    steps = _ceil_div(N, TN)
    if steps == 1 and N > 8:
        steps = 2
    if steps > 1 and steps % 2:
        steps += 1
    return max(8, _ceil_div(_ceil_div(N, steps), 8) * 8)


def gated_mlp_concat(x, gate_ids, prepared, *, D, G, SM=2, GM=1,
                     block_rows=512, vmem_limit_bytes=None):
    """x: (N, input_dim) f32, gate_ids: (N, 1) int.  Returns (N, output_size) f32."""
    N, in_dim = x.shape
    S, GMD = SM * D, GM * D
    H1 = S + G * GMD
    out_dim = prepared["w3"].shape[1]
    assert S % GMD == 0, "straight width must be a multiple of GM*D for the group mask"
    SG = S // GMD
    GMD_SHIFT = GMD.bit_length() - 1 if (GMD & (GMD - 1)) == 0 else None

    TN = _choose_row_tile(N, block_rows)
    N_pad = _ceil_div(N, TN) * TN
    if N_pad != N:
        # Padded rows use gate 0 and are sliced off afterwards; x stays f32
        # (the bf16 cast happens inside the kernel).
        x = jnp.pad(x, ((0, N_pad - N), (0, 0)))
        gate_ids = jnp.pad(gate_ids, ((0, N_pad - N), (0, 0)))
    gate_ids = gate_ids.astype(jnp.int32)

    kernel = functools.partial(_gated_mlp_kernel, SG=SG, GMD=GMD, GMD_SHIFT=GMD_SHIFT)
    const = lambda i: (0, 0)                 # VMEM-resident weights/biases
    rows = lambda i: (i, 0)                  # per-step row tile

    cp = dict(dimension_semantics=("parallel",))
    if vmem_limit_bytes is not None:         # set explicitly when scaling shapes
        cp["vmem_limit_bytes"] = vmem_limit_bytes

    out = pl.pallas_call(
        kernel,
        grid=(N_pad // TN,),
        in_specs=[
            pl.BlockSpec((TN, 1), rows),          # gate_ids
            pl.BlockSpec((TN, in_dim), rows),     # x (f32, cast in-kernel)
            pl.BlockSpec((in_dim, H1), const),    # w1 (fused straight|gated)
            pl.BlockSpec((1, H1), const),         # b1 (fused)
            pl.BlockSpec((H1, D), const),         # w2 (gate-tiled)
            pl.BlockSpec((1, D), const),          # b2
            pl.BlockSpec((D, out_dim), const),    # w3 (unpadded)
        ],
        out_specs=pl.BlockSpec((TN, out_dim), rows),
        out_shape=jax.ShapeDtypeStruct((N_pad, out_dim), jnp.float32),
        compiler_params=pltpu.CompilerParams(**cp),
    )(gate_ids, x, prepared["w1"], prepared["b1"], prepared["w2"],
      prepared["b2"], prepared["w3"])

    return out[:N] if N_pad != N else out


def _reference(x, gate_ids, params, *, D, G, SM=2, GM=1):
    """Pure f32 JAX reference matching the PyTorch module."""
    hs = jnp.maximum(x @ params["w1s"] + params["b1s"], 0.0)
    hg = jnp.maximum(x @ params["w1g"] + params["b1g"], 0.0)
    mask = jax.nn.one_hot(gate_ids[:, 0], G)                        # (N, G)
    mask = jnp.repeat(mask[:, :, None], GM * D, axis=2).reshape(x.shape[0], G * GM * D)
    hg = (hg * mask).reshape(x.shape[0], G, GM * D).sum(axis=1)
    cat = jnp.concatenate([hs, hg], axis=1)
    h2 = jnp.maximum(cat @ params["w2"] + params["b2"], 0.0)
    return h2 @ params["w3"]


if __name__ == "__main__":
    # Small deterministic configuration (N chosen to exercise the multi-step grid).
    N, input_dim, D, G, output_size = 384, 32, 32, 4, 16
    SM, GM = 2, 1

    key = jax.random.PRNGKey(0)
    ks = jax.random.split(key, 9)

    params = {
        # weights stored as (in_features, out_features) = transpose of torch Linear.weight
        "w1s": jax.random.normal(ks[0], (input_dim, SM * D), jnp.float32) * 0.1,
        "b1s": jax.random.normal(ks[1], (1, SM * D), jnp.float32) * 0.1,
        "w1g": jax.random.normal(ks[2], (input_dim, G * GM * D), jnp.float32) * 0.1,
        "b1g": jax.random.normal(ks[3], (1, G * GM * D), jnp.float32) * 0.1,
        "w2":  jax.random.normal(ks[4], ((SM + GM) * D, D), jnp.float32) * 0.1,
        "b2":  jax.random.normal(ks[5], (1, D), jnp.float32) * 0.1,
        "w3":  jax.random.normal(ks[6], (D, output_size), jnp.float32) * 0.1,
    }

    x = jax.random.normal(ks[7], (N, input_dim), jnp.float32)
    gate_ids = jax.random.randint(ks[8], (N, 1), 0, G, jnp.int32)

    # One-time weight preparation (fusion / tiling / bf16 casts), then a jitted
    # forward so any residual wrapper ops fuse with the pallas_call.
    prepared = prepare_gated_mlp_params(params, D=D, G=G, SM=SM, GM=GM)
    fwd = jax.jit(functools.partial(gated_mlp_concat, D=D, G=G, SM=SM, GM=GM,
                                    block_rows=512))
    out = jax.block_until_ready(fwd(x, gate_ids, prepared))

    ref = _reference(x, gate_ids, params, D=D, G=G, SM=SM, GM=GM)
    assert out.shape == (N, output_size)
    # Tolerance accounts for bf16 matmul operands (f32 accumulation) vs f32 reference.
    assert jnp.allclose(out, ref, atol=8e-3, rtol=4e-2), (
        "mismatch vs reference: max abs diff = %g" % float(jnp.max(jnp.abs(out - ref))))

    print("KERNEL_OK")
</pallas_src>

<mosaic_0001>
module attributes {stable_mosaic.version = 11 : i64} {
  func.func @_gated_mlp_kernel(%arg0: i32, %arg1: memref<192x1xi32, #tpu.memory_space<vmem>>, %arg2: memref<192x32xf32, #tpu.memory_space<vmem>>, %arg3: memref<32x192xbf16, #tpu.memory_space<vmem>>, %arg4: memref<1x192xf32, #tpu.memory_space<vmem>>, %arg5: memref<192x32xbf16, #tpu.memory_space<vmem>>, %arg6: memref<1x32xf32, #tpu.memory_space<vmem>>, %arg7: memref<32x16xbf16, #tpu.memory_space<vmem>>, %arg8: memref<192x16xf32, #tpu.memory_space<vmem>>) attributes {dimension_semantics = [#tpu.dimension_semantics<parallel>], iteration_bounds = array<i64: 2>, scalar_prefetch = 0 : i64, scratch_operands = 0 : i64, tpu.core_type = #tpu.core_type<tc>, window_params = [{transform_indices = @transform_0, window_bounds = array<i64: 192, 1>}, {transform_indices = @transform_1, window_bounds = array<i64: 192, 32>}, {pipeline_mode = #tpu.pipeline_mode<synchronous>, transform_indices = @transform_2, window_bounds = array<i64: 32, 192>}, {pipeline_mode = #tpu.pipeline_mode<synchronous>, transform_indices = @transform_3, window_bounds = array<i64: 1, 192>}, {pipeline_mode = #tpu.pipeline_mode<synchronous>, transform_indices = @transform_4, window_bounds = array<i64: 192, 32>}, {pipeline_mode = #tpu.pipeline_mode<synchronous>, transform_indices = @transform_5, window_bounds = array<i64: 1, 32>}, {pipeline_mode = #tpu.pipeline_mode<synchronous>, transform_indices = @transform_6, window_bounds = array<i64: 32, 16>}, {transform_indices = @transform_7, window_bounds = array<i64: 192, 16>}]} {
    %c0 = arith.constant 0 : index
    %c0_0 = arith.constant 0 : index
    %0 = vector.load %arg2[%c0, %c0_0] : memref<192x32xf32, #tpu.memory_space<vmem>>, vector<192x32xf32>
    %1 = arith.truncf %0 : vector<192x32xf32> to vector<192x32xbf16>
    %c0_1 = arith.constant 0 : index
    %c0_2 = arith.constant 0 : index
    %2 = vector.load %arg3[%c0_1, %c0_2] : memref<32x192xbf16, #tpu.memory_space<vmem>>, vector<32x192xbf16>
    %cst = arith.constant dense<0.000000e+00> : vector<192x192xf32>
    %3 = tpu.matmul %1, %2, %cst {dimension_numbers = #tpu.dot_dimension_numbers<[1], [0], [0], [1], [0, 0, 1, 1], [], []>} : vector<192x32xbf16>, vector<32x192xbf16>, vector<192x192xf32> -> vector<192x192xf32>
    %c0_3 = arith.constant 0 : index
    %c0_4 = arith.constant 0 : index
    %4 = vector.load %arg4[%c0_3, %c0_4] : memref<1x192xf32, #tpu.memory_space<vmem>>, vector<1x192xf32>
    %5 = vector.broadcast %4 : vector<1x192xf32> to vector<192x192xf32>
    %6 = arith.addf %3, %5 : vector<192x192xf32>
    %cst_5 = arith.constant 0.000000e+00 : f32
    %7 = vector.broadcast %cst_5 : f32 to vector<192x192xf32>
    %8 = arith.maximumf %6, %7 : vector<192x192xf32>
    %c0_6 = arith.constant 0 : index
    %c0_7 = arith.constant 0 : index
    %9 = vector.load %arg1[%c0_6, %c0_7] : memref<192x1xi32, #tpu.memory_space<vmem>>, vector<192x1xi32>
    %10 = tpu.iota {dimensions = array<i32: 1>} : vector<1x192xi32>
    %c5_i32 = arith.constant 5 : i32
    %11 = vector.broadcast %c5_i32 : i32 to vector<1x192xi32>
    %12 = arith.shrsi %10, %11 : vector<1x192xi32>
    %c2_i32 = arith.constant 2 : i32
    %13 = vector.broadcast %c2_i32 : i32 to vector<1x192xi32>
    %14 = arith.cmpi slt, %12, %13 : vector<1x192xi32>
    %c2_i32_8 = arith.constant 2 : i32
    %15 = vector.broadcast %c2_i32_8 : i32 to vector<192x1xi32>
    %16 = arith.addi %9, %15 : vector<192x1xi32>
    %17 = vector.broadcast %12 : vector<1x192xi32> to vector<192x192xi32>
    %18 = vector.broadcast %16 : vector<192x1xi32> to vector<192x192xi32>
    %19 = arith.cmpi eq, %17, %18 : vector<192x192xi32>
    %20 = vector.broadcast %14 : vector<1x192xi1> to vector<192x192xi1>
    %21 = arith.ori %20, %19 : vector<192x192xi1>
    %22 = arith.truncf %8 : vector<192x192xf32> to vector<192x192xbf16>
    %cst_9 = arith.constant 0.000000e+00 : f32
    %23 = arith.truncf %cst_9 : f32 to bf16
    %24 = vector.broadcast %23 : bf16 to vector<192x192xbf16>
    %25 = arith.select %21, %22, %24 : vector<192x192xi1>, vector<192x192xbf16>
    %c0_10 = arith.constant 0 : index
    %c0_11 = arith.constant 0 : index
    %26 = vector.load %arg5[%c0_10, %c0_11] : memref<192x32xbf16, #tpu.memory_space<vmem>>, vector<192x32xbf16>
    %cst_12 = arith.constant dense<0.000000e+00> : vector<192x32xf32>
    %27 = tpu.matmul %25, %26, %cst_12 {dimension_numbers = #tpu.dot_dimension_numbers<[1], [0], [0], [1], [0, 0, 1, 1], [], []>} : vector<192x192xbf16>, vector<192x32xbf16>, vector<192x32xf32> -> vector<192x32xf32>
    %c0_13 = arith.constant 0 : index
    %c0_14 = arith.constant 0 : index
    %28 = vector.load %arg6[%c0_13, %c0_14] : memref<1x32xf32, #tpu.memory_space<vmem>>, vector<1x32xf32>
    %29 = vector.broadcast %28 : vector<1x32xf32> to vector<192x32xf32>
    %30 = arith.addf %27, %29 : vector<192x32xf32>
    %cst_15 = arith.constant 0.000000e+00 : f32
    %31 = vector.broadcast %cst_15 : f32 to vector<192x32xf32>
    %32 = arith.maximumf %30, %31 : vector<192x32xf32>
    %33 = arith.truncf %32 : vector<192x32xf32> to vector<192x32xbf16>
    %c0_16 = arith.constant 0 : index
    %c0_17 = arith.constant 0 : index
    %34 = vector.load %arg7[%c0_16, %c0_17] : memref<32x16xbf16, #tpu.memory_space<vmem>>, vector<32x16xbf16>
    %cst_18 = arith.constant dense<0.000000e+00> : vector<192x16xf32>
    %35 = tpu.matmul %33, %34, %cst_18 {dimension_numbers = #tpu.dot_dimension_numbers<[1], [0], [0], [1], [0, 0, 1, 1], [], []>} : vector<192x32xbf16>, vector<32x16xbf16>, vector<192x16xf32> -> vector<192x16xf32>
    %c0_19 = arith.constant 0 : index
    %c0_20 = arith.constant 0 : index
    %36 = vector.load %arg8[%c0_19, %c0_20] : memref<192x16xf32, #tpu.memory_space<vmem>>, vector<192x16xf32>
    tpu.vector_store %arg8[%c0_19, %c0_20], %35 {strides = array<i32>} : memref<192x16xf32, #tpu.memory_space<vmem>>, vector<192x16xf32>,
    return
  }
  func.func @transform_0(%arg0: i32) -> (i32, i32) {
    %c0_i32 = arith.constant 0 : i32
    %c0_i32_0 = arith.constant 0 : i32
    return %arg0, %c0_i32 : i32, i32
  }
  func.func @transform_1(%arg0: i32) -> (i32, i32) {
    %c0_i32 = arith.constant 0 : i32
    %c0_i32_0 = arith.constant 0 : i32
    return %arg0, %c0_i32 : i32, i32
  }
  func.func @transform_2(%arg0: i32) -> (i32, i32) {
    %c0_i32 = arith.constant 0 : i32
    %c0_i32_0 = arith.constant 0 : i32
    %c0_i32_1 = arith.constant 0 : i32
    return %c0_i32, %c0_i32_0 : i32, i32
  }
  func.func @transform_3(%arg0: i32) -> (i32, i32) {
    %c0_i32 = arith.constant 0 : i32
    %c0_i32_0 = arith.constant 0 : i32
    %c0_i32_1 = arith.constant 0 : i32
    return %c0_i32, %c0_i32_0 : i32, i32
  }
  func.func @transform_4(%arg0: i32) -> (i32, i32) {
    %c0_i32 = arith.constant 0 : i32
    %c0_i32_0 = arith.constant 0 : i32
    %c0_i32_1 = arith.constant 0 : i32
    return %c0_i32, %c0_i32_0 : i32, i32
  }
  func.func @transform_5(%arg0: i32) -> (i32, i32) {
    %c0_i32 = arith.constant 0 : i32
    %c0_i32_0 = arith.constant 0 : i32
    %c0_i32_1 = arith.constant 0 : i32
    return %c0_i32, %c0_i32_0 : i32, i32
  }
  func.func @transform_6(%arg0: i32) -> (i32, i32) {
    %c0_i32 = arith.constant 0 : i32
    %c0_i32_0 = arith.constant 0 : i32
    %c0_i32_1 = arith.constant 0 : i32
    return %c0_i32, %c0_i32_0 : i32, i32
  }
  func.func @transform_7(%arg0: i32) -> (i32, i32) {
    %c0_i32 = arith.constant 0 : i32
    %c0_i32_0 = arith.constant 0 : i32
    return %arg0, %c0_i32 : i32, i32
  }
}

</mosaic_0001>

<llo_original>
// kernel: gated_mlp_concat.1
$region0: #{gated_mlp_concat.1}
  #allocation0 [shape = 'u32[]', space=smem, size = 0x4, offset = 0x4, fixed_abs, tag = 'smem constant byte address 0x4 - core index']
  #allocation1 [shape = 'u32[144,128]{1,0:T(1,128)}', space=vmem, size = 0x12000, scoped, tag = 'internal scratch']
  %s0 = inlined_call_operand.vmem [shape: s32[384,1], index: 0, kind: input, shape index: {}]
  %s1 = inlined_call_operand.vmem [shape: f32[384,32], index: 1, kind: input, shape index: {}]
  %s2 = inlined_call_operand.vmem [shape: bf16[32,192], index: 2, kind: input, shape index: {}]
  %s3 = inlined_call_operand.vmem [shape: f32[1,192], index: 3, kind: input, shape index: {}]
  %s4 = inlined_call_operand.vmem [shape: bf16[192,32], index: 4, kind: input, shape index: {}]
  %s5 = inlined_call_operand.vmem [shape: f32[1,32], index: 5, kind: input, shape index: {}]
  %s6 = inlined_call_operand.vmem [shape: bf16[32,16], index: 6, kind: input, shape index: {}]
  %s7 = inlined_call_operand.vmem [shape: f32[384,16], index: 7, kind: output, shape index: {}]
  %s8 = sld [smem:[#allocation0]]
  $region61: #{gated_mlp_concat.1} parent=0
    _
  %s10 = ssub.s32 1, %s8
  %s11 = scalar_select 0, %s10, %s8
  loop: start=0, step=1, limit=4
  $region2: #{gated_mlp_concat.1} parent=0 // loop_pre_header
    _
  $region3: #{gated_mlp_concat.1} parent=0 // loop_header
    %s13 = sphi 0, %s17
    %p14 = scmp.ge.s32.totalorder %s13, 4
    %s23 = sphi 0, %s25
    %s26 = sphi 0, %s23
    %s27 = sphi 0, %s26
    %s43 = sphi 0, %s27
    %s49 = sphi 0, %s51
    %s52 = sphi 0, %s49
    %s53 = sphi 0, %s52
    %s69 = sphi 0, %s53
    %s73 = sphi 0, %s73
    %s75 = sphi 0, %s73
    %s76 = sphi 0, %s75
    %s90 = sphi 0, %s76
    %s94 = sphi 0, %s94
    %s96 = sphi 0, %s94
    %s97 = sphi 0, %s96
    %s111 = sphi 0, %s97
    %s115 = sphi 0, %s115
    %s117 = sphi 0, %s115
    %s118 = sphi 0, %s117
    %s132 = sphi 0, %s118
    %s136 = sphi 0, %s136
    %s138 = sphi 0, %s136
    %s139 = sphi 0, %s138
    %s153 = sphi 0, %s139
    %s157 = sphi 0, %s157
    %s159 = sphi 0, %s157
    %s160 = sphi 0, %s159
    %s174 = sphi 0, %s160
    %s180 = sphi 0, %s182
    %s183 = sphi 0, %s180
    %s184 = sphi 0, %s183
    %s200 = sphi 0, %s184
  $region4: #{gated_mlp_concat.1} parent=0 // loop_header_branch
    %16 = sbr.rel (%p14) target = $region8
  $region5: #{gated_mlp_concat.1} parent=0 // loop_body
    %s18 = ssub.s32 %s13, 1
    %s19 = ssub.s32 %s13, 2
    %s20 = sadd.s32 %s13, 1
    %s21 = ssub.s32 %s13, %s20
    %p22 = scmp.eq.s32.totalorder %s21, 0
    %s24 = sadd.s32 %s23, 1
    %s25 = scalar_select %p22, %s23, %s24
    %p28 = pneg %p22
    %p29 = scmp.eq.s32.totalorder %s13, 1
    %p30 = por %p28, %p29
    %p31 = scmp.ne.s32.totalorder %s23, %s26
    %p32 = scmp.eq.s32.totalorder %s13, 0
    %p33 = por %p31, %p32
    %p34 = scmp.ne.s32.totalorder %s23, %s26
    %p35 = scmp.eq.s32.totalorder %s18, 1
    %p36 = por %p34, %p35
    %p37 = scmp.ne.s32.totalorder %s26, %s27
    %p38 = scmp.eq.s32.totalorder %s18, 0
    %p39 = por %p37, %p38
    %p40 = scmp.ne.s32.totalorder %s26, %s27
    %p41 = scmp.eq.s32.totalorder %s19, 1
    %p42 = por %p40, %p41
    %p44 = scmp.ne.s32.totalorder %s27, %s43
    %p45 = scmp.eq.s32.totalorder %s19, 0
    %p46 = por %p44, %p45
    %s47 = ssub.s32 %s13, %s20
    %p48 = scmp.eq.s32.totalorder %s47, 0
    %s50 = sadd.s32 %s49, 1
    %s51 = scalar_select %p48, %s49, %s50
    %p54 = pneg %p48
    %p55 = scmp.eq.s32.totalorder %s13, 1
    %p56 = por %p54, %p55
    %p57 = scmp.ne.s32.totalorder %s49, %s52
    %p58 = scmp.eq.s32.totalorder %s13, 0
    %p59 = por %p57, %p58
    %p60 = scmp.ne.s32.totalorder %s49, %s52
    %p61 = scmp.eq.s32.totalorder %s18, 1
    %p62 = por %p60, %p61
    %p63 = scmp.ne.s32.totalorder %s52, %s53
    %p64 = scmp.eq.s32.totalorder %s18, 0
    %p65 = por %p63, %p64
    %p66 = scmp.ne.s32.totalorder %s52, %s53
    %p67 = scmp.eq.s32.totalorder %s19, 1
    %p68 = por %p66, %p67
    %p70 = scmp.ne.s32.totalorder %s53, %s69
    %p71 = scmp.eq.s32.totalorder %s19, 0
    %p72 = por %p70, %p71
    %s74 = sadd.s32 %s73, 1
    %p77 = scmp.eq.s32.totalorder %s13, 1
    %p78 = scmp.ne.s32.totalorder %s73, %s75
    %p79 = scmp.eq.s32.totalorder %s13, 0
    %p80 = por %p78, %p79
    %p81 = scmp.ne.s32.totalorder %s73, %s75
    %p82 = scmp.eq.s32.totalorder %s18, 1
    %p83 = por %p81, %p82
    %p84 = scmp.ne.s32.totalorder %s75, %s76
    %p85 = scmp.eq.s32.totalorder %s18, 0
    %p86 = por %p84, %p85
    %p87 = scmp.ne.s32.totalorder %s75, %s76
    %p88 = scmp.eq.s32.totalorder %s19, 1
    %p89 = por %p87, %p88
    %p91 = scmp.ne.s32.totalorder %s76, %s90
    %p92 = scmp.eq.s32.totalorder %s19, 0
    %p93 = por %p91, %p92
    %s95 = sadd.s32 %s94, 1
    %p98 = scmp.eq.s32.totalorder %s13, 1
    %p99 = scmp.ne.s32.totalorder %s94, %s96
    %p100 = scmp.eq.s32.totalorder %s13, 0
    %p101 = por %p99, %p100
    %p102 = scmp.ne.s32.totalorder %s94, %s96
    %p103 = scmp.eq.s32.totalorder %s18, 1
    %p104 = por %p102, %p103
    %p105 = scmp.ne.s32.totalorder %s96, %s97
    %p106 = scmp.eq.s32.totalorder %s18, 0
    %p107 = por %p105, %p106
    %p108 = scmp.ne.s32.totalorder %s96, %s97
    %p109 = scmp.eq.s32.totalorder %s19, 1
    %p110 = por %p108, %p109
    %p112 = scmp.ne.s32.totalorder %s97, %s111
    %p113 = scmp.eq.s32.totalorder %s19, 0
    %p114 = por %p112, %p113
    %s116 = sadd.s32 %s115, 1
    %p119 = scmp.eq.s32.totalorder %s13, 1
    %p120 = scmp.ne.s32.totalorder %s115, %s117
    %p121 = scmp.eq.s32.totalorder %s13, 0
    %p122 = por %p120, %p121
    %p123 = scmp.ne.s32.totalorder %s115, %s117
    %p124 = scmp.eq.s32.totalorder %s18, 1
    %p125 = por %p123, %p124
    %p126 = scmp.ne.s32.totalorder %s117, %s118
    %p127 = scmp.eq.s32.totalorder %s18, 0
    %p128 = por %p126, %p127
    %p129 = scmp.ne.s32.totalorder %s117, %s118
    %p130 = scmp.eq.s32.totalorder %s19, 1
    %p131 = por %p129, %p130
    %p133 = scmp.ne.s32.totalorder %s118, %s132
    %p134 = scmp.eq.s32.totalorder %s19, 0
    %p135 = por %p133, %p134
    %s137 = sadd.s32 %s136, 1
    %p140 = scmp.eq.s32.totalorder %s13, 1
    %p141 = scmp.ne.s32.totalorder %s136, %s138
    %p142 = scmp.eq.s32.totalorder %s13, 0
    %p143 = por %p141, %p142
    %p144 = scmp.ne.s32.totalorder %s136, %s138
    %p145 = scmp.eq.s32.totalorder %s18, 1
    %p146 = por %p144, %p145
    %p147 = scmp.ne.s32.totalorder %s138, %s139
    %p148 = scmp.eq.s32.totalorder %s18, 0
    %p149 = por %p147, %p148
    %p150 = scmp.ne.s32.totalorder %s138, %s139
    %p151 = scmp.eq.s32.totalorder %s19, 1
    %p152 = por %p150, %p151
    %p154 = scmp.ne.s32.totalorder %s139, %s153
    %p155 = scmp.eq.s32.totalorder %s19, 0
    %p156 = por %p154, %p155
    %s158 = sadd.s32 %s157, 1
    %p161 = scmp.eq.s32.totalorder %s13, 1
    %p162 = scmp.ne.s32.totalorder %s157, %s159
    %p163 = scmp.eq.s32.totalorder %s13, 0
    %p164 = por %p162, %p163
    %p165 = scmp.ne.s32.totalorder %s157, %s159
    %p166 = scmp.eq.s32.totalorder %s18, 1
    %p167 = por %p165, %p166
    %p168 = scmp.ne.s32.totalorder %s159, %s160
    %p169 = scmp.eq.s32.totalorder %s18, 0
    %p170 = por %p168, %p169
    %p171 = scmp.ne.s32.totalorder %s159, %s160
    %p172 = scmp.eq.s32.totalorder %s19, 1
    %p173 = por %p171, %p172
    %p175 = scmp.ne.s32.totalorder %s160, %s174
    %p176 = scmp.eq.s32.totalorder %s19, 0
    %p177 = por %p175, %p176
    %s178 = ssub.s32 %s13, %s20
    %p179 = scmp.eq.s32.totalorder %s178, 0
    %s181 = sadd.s32 %s180, 1
    %s182 = scalar_select %p179, %s180, %s181
    %p185 = pneg %p179
    %p186 = scmp.eq.s32.totalorder %s13, 1
    %p187 = por %p185, %p186
    %p188 = scmp.ne.s32.totalorder %s180, %s183
    %p189 = scmp.eq.s32.totalorder %s13, 0
    %p190 = por %p188, %p189
    %p191 = scmp.ne.s32.totalorder %s180, %s183
    %p192 = scmp.eq.s32.totalorder %s18, 1
    %p193 = por %p191, %p192
    %p194 = scmp.ne.s32.totalorder %s183, %s184
    %p195 = scmp.eq.s32.totalorder %s18, 0
    %p196 = por %p194, %p195
    %p197 = scmp.ne.s32.totalorder %s183, %s184
    %p198 = scmp.eq.s32.totalorder %s19, 1
    %p199 = por %p197, %p198
    %p201 = scmp.ne.s32.totalorder %s184, %s200
    %p202 = scmp.eq.s32.totalorder %s19, 0
    %p203 = por %p201, %p202
    %p204 = scmp.le.s32.totalorder 1, %s13
    %p205 = scmp.lt.s32.totalorder %s13, 3
    %p206 = pnand %p204, %p205
    %p207 = pneg %p206
    // Predicated region
    $region9: #{gated_mlp_concat.1} parent=5 // pred_check
      _
    $region10: #{gated_mlp_concat.1} parent=5 // pred_check_branch
      %209 = sbr.rel (%p206) target = $region12
    $region11: #{gated_mlp_concat.1} parent=5 // pred_region
      %s210 = ssub.s32 %s13, 1
      // Predicated region
      $region13: #{gated_mlp_concat.1} parent=11 // pred_check
        %p211 = pneg %p86
      $region14: #{gated_mlp_concat.1} parent=11 // pred_check_branch
        %213 = sbr.rel (%p211) target = $region16
      $region15: #{gated_mlp_concat.1} parent=11 // pred_region
        _
      $region16: #{gated_mlp_concat.1} parent=11 // pred_fallthru
        _
      // Predicated region
      $region17: #{gated_mlp_concat.1} parent=11 // pred_check
        %p214 = pneg %p107
      $region18: #{gated_mlp_concat.1} parent=11 // pred_check_branch
        %216 = sbr.rel (%p214) target = $region20
      $region19: #{gated_mlp_concat.1} parent=11 // pred_region
        _
      $region20: #{gated_mlp_concat.1} parent=11 // pred_fallthru
        _
      // Predicated region
      $region21: #{gated_mlp_concat.1} parent=11 // pred_check
        %p217 = pneg %p128
      $region22: #{gated_mlp_concat.1} parent=11 // pred_check_branch
        %219 = sbr.rel (%p217) target = $region24
      $region23: #{gated_mlp_concat.1} parent=11 // pred_region
        _
      $region24: #{gated_mlp_concat.1} parent=11 // pred_fallthru
        _
      // Predicated region
      $region25: #{gated_mlp_concat.1} parent=11 // pred_check
        %p220 = pneg %p149
      $region26: #{gated_mlp_concat.1} parent=11 // pred_check_branch
        %222 = sbr.rel (%p220) target = $region28
      $region27: #{gated_mlp_concat.1} parent=11 // pred_region
        _
      $region28: #{gated_mlp_concat.1} parent=11 // pred_fallthru
        _
      // Predicated region
      $region29: #{gated_mlp_concat.1} parent=11 // pred_check
        %p223 = pneg %p170
      $region30: #{gated_mlp_concat.1} parent=11 // pred_check_branch
        %225 = sbr.rel (%p223) target = $region32
      $region31: #{gated_mlp_concat.1} parent=11 // pred_region
        _
      $region32: #{gated_mlp_concat.1} parent=11 // pred_fallthru
        _
    $region12: #{gated_mlp_concat.1} parent=5 // pred_fallthru
      _
    %p226 = scmp.lt.s32.totalorder %s13, 2
    // Predicated region
    $region33: #{gated_mlp_concat.1} parent=5 // pred_check
      %p227 = pneg %p226
    $region34: #{gated_mlp_concat.1} parent=5 // pred_check_branch
      %229 = sbr.rel (%p227) target = $region36
    $region35: #{gated_mlp_concat.1} parent=5 // pred_region
      // Predicated region
      $region37: #{gated_mlp_concat.1} parent=35 // pred_check
        %p230 = pneg %p33
      $region38: #{gated_mlp_concat.1} parent=35 // pred_check_branch
        %232 = sbr.rel (%p230) target = $region40
      $region39: #{gated_mlp_concat.1} parent=35 // pred_region
        %s233 = smul.u32 24, %s13
        %p234 = scmp.lt.s32.totalorder %s233, 47
        %s235 = scalar_select %p234, %s233, 47
        %s236 = smul.addr %s235, 8
        %s237 = scalar_lea.vmem %s0, %s236
        %s238 = smul.u32 24, %s13
      $region40: #{gated_mlp_concat.1} parent=35 // pred_fallthru
        _
      // Predicated region
      $region41: #{gated_mlp_concat.1} parent=35 // pred_check
        %p239 = pneg %p59
      $region42: #{gated_mlp_concat.1} parent=35 // pred_check_branch
        %241 = sbr.rel (%p239) target = $region44
      $region43: #{gated_mlp_concat.1} parent=35 // pred_region
        %s242 = smul.u32 24, %s13
        %p243 = scmp.lt.s32.totalorder %s242, 47
        %s244 = scalar_select %p243, %s242, 47
        %s245 = smul.addr %s244, 8
        %s246 = scalar_lea.vmem %s1, %s245
        %s247 = smul.u32 24, %s13
      $region44: #{gated_mlp_concat.1} parent=35 // pred_fallthru
        _
    $region36: #{gated_mlp_concat.1} parent=5 // pred_fallthru
      _
    %p248 = scmp.le.s32.totalorder 1, %s13
    %p249 = scmp.lt.s32.totalorder %s13, 3
    %p250 = pnand %p248, %p249
    %p251 = pneg %p250
    // Predicated region
    $region45: #{gated_mlp_concat.1} parent=5 // pred_check
      _
    $region46: #{gated_mlp_concat.1} parent=5 // pred_check_branch
      %253 = sbr.rel (%p250) target = $region48
    $region47: #{gated_mlp_concat.1} parent=5 // pred_region
      %s254 = ssub.s32 %s13, 1
      %s255 = smul.u32 24, %s18
      %p256 = scmp.lt.s32.totalorder %s255, 47
      %s257 = scalar_select %p256, %s255, 47
      %s258 = smul.addr %s257, 8
      %s259 = scalar_lea.vmem %s0, %s258
      %p260 = pneg %p39
      %p261 = pneg %p36
      %s262 = smul.u32 24, %s18
      %p263 = scmp.lt.s32.totalorder %s262, 47
      %s264 = scalar_select %p263, %s262, 47
      %s265 = smul.addr %s264, 8
      %s266 = scalar_lea.vmem %s1, %s265
      %p267 = pneg %p65
      %p268 = pneg %p62
      %p269 = pneg %p86
      %p270 = pneg %p83
      %p271 = pneg %p107
      %p272 = pneg %p104
      %p273 = pneg %p128
      %p274 = pneg %p125
      %p275 = pneg %p149
      %p276 = pneg %p146
      %p277 = pneg %p170
      %p278 = pneg %p167
      %p279 = pneg %p196
      %p280 = pneg %p193
      %s281 = smul.u32 24, %s18
      %p282 = scmp.lt.s32.totalorder %s281, 47
      %s283 = scalar_select %p282, %s281, 47
      %s284 = smul.addr %s283, 8
      %s285 = scalar_lea.vmem %s7, %s284
      %s286 = smul.u32 24, %s18
      %p287 = scmp.lt.s32.totalorder %s286, 47
      %s288 = scalar_select %p287, %s286, 47
      %s289 = smul.addr %s288, 8
      %s290 = scalar_lea.vmem %s0, %s289
      %s291 = smul.u32 24, %s18
      %s292 = smul.u32 24, %s18
      %p293 = scmp.lt.s32.totalorder %s292, 47
      %s294 = scalar_select %p293, %s292, 47
      %s295 = smul.addr %s294, 8
      %s296 = scalar_lea.vmem %s1, %s295
      %s297 = smul.u32 24, %s18
      %s298 = smul.u32 24, %s18
      %p299 = scmp.lt.s32.totalorder %s298, 47
      %s300 = scalar_select %p299, %s298, 47
      %s301 = smul.addr %s300, 8
      %s302 = scalar_lea.vmem %s7, %s301
      %s303 = smul.u32 24, %s18
      %v305 = vld [vmem:[%s296] sm:$0xff]
      %v306 = vld [vmem:[%s296 + $0x8] sm:$0xff]
      %v307 = vld [vmem:[%s296 + $0x10] sm:$0xff]
      %v308 = vld [vmem:[%s296 + $0x18] sm:$0xff]
      %v309 = vld [vmem:[%s296 + $0x20] sm:$0xff]
      %v310 = vld [vmem:[%s296 + $0x28] sm:$0xff]
      %v311 = vld [vmem:[%s296 + $0x30] sm:$0xff]
      %v312 = vld [vmem:[%s296 + $0x38] sm:$0xff]
      %v313 = vld [vmem:[%s296 + $0x40] sm:$0xff]
      %v314 = vld [vmem:[%s296 + $0x48] sm:$0xff]
      %v315 = vld [vmem:[%s296 + $0x50] sm:$0xff]
      %v316 = vld [vmem:[%s296 + $0x58] sm:$0xff]
      %v317 = vld [vmem:[%s296 + $0x60] sm:$0xff]
      %v318 = vld [vmem:[%s296 + $0x68] sm:$0xff]
      %v319 = vld [vmem:[%s296 + $0x70] sm:$0xff]
      %v320 = vld [vmem:[%s296 + $0x78] sm:$0xff]
      %v321 = vld [vmem:[%s296 + $0x80] sm:$0xff]
      %v322 = vld [vmem:[%s296 + $0x88] sm:$0xff]
      %v323 = vld [vmem:[%s296 + $0x90] sm:$0xff]
      %v324 = vld [vmem:[%s296 + $0x98] sm:$0xff]
      %v325 = vld [vmem:[%s296 + $0xa0] sm:$0xff]
      %v326 = vld [vmem:[%s296 + $0xa8] sm:$0xff]
      %v327 = vld [vmem:[%s296 + $0xb0] sm:$0xff]
      %v328 = vld [vmem:[%s296 + $0xb8] sm:$0xff]
      %v329 = vpack.c.bf16 %v306, %v305
      %v330 = vpack.c.bf16 %v308, %v307
      %v331 = vpack.c.bf16 %v310, %v309
      %v332 = vpack.c.bf16 %v312, %v311
      %v333 = vpack.c.bf16 %v314, %v313
      %v334 = vpack.c.bf16 %v316, %v315
      %v335 = vpack.c.bf16 %v318, %v317
      %v336 = vpack.c.bf16 %v320, %v319
      %v337 = vpack.c.bf16 %v322, %v321
      %v338 = vpack.c.bf16 %v324, %v323
      %v339 = vpack.c.bf16 %v326, %v325
      %v340 = vpack.c.bf16 %v328, %v327
      %v341 = vld [vmem:[%s2] sm:$0xff]
      %v342 = vld [vmem:[%s2 + $0x8] sm:$0xff]
      %v343 = vld [vmem:[%s2 + $0x10] sm:$0xff]
      %v344 = vld [vmem:[%s2 + $0x18] sm:$0xff]
      %v345 = vld [vmem:[%s3] sm:$0x3]
      %v347 = vlaneseq
      %v348 = vshrl.u32 %v347, 7
      %v349 = vsub.s32 0, %v348
      %v350 = vrot.slane %v345, %v349
      %v351 = vlaneseq
      %v352 = vshrl.u32 %v351, 7
      %v353 = vsub.s32 1, %v352
      %v354 = vrot.slane %v345, %v353
      %v361 = vunpack.c.l.b16 %v341
      %v362 = vunpack.c.h.b16 %v341
      %v363 = vunpack.c.l.b16 %v342
      %v364 = vunpack.c.h.b16 %v342
      %v365 = vunpack.c.l.b16 %v343
      %v366 = vunpack.c.h.b16 %v343
      %v367 = vunpack.c.l.b16 %v344
      %v368 = vunpack.c.h.b16 %v344
      %v369 = vpack.c.b16 %v363, %v361
      %v370 = vpack.c.b16 %v364, %v362
      %v371 = vpack.c.b16 %v367, %v365
      %v372 = vpack.c.b16 %v368, %v366
      %vm377 = vcmask 261120
      %v379 = vsel %vm377, %v329, 0
      %v382 = vsel %vm377, %v330, 0
      %v385 = vsel %vm377, %v331, 0
      %v388 = vsel %vm377, %v332, 0
      %v391 = vsel %vm377, %v333, 0
      %v394 = vsel %vm377, %v334, 0
      %v397 = vsel %vm377, %v335, 0
      %v400 = vsel %vm377, %v336, 0
      %v403 = vsel %vm377, %v337, 0
      %v406 = vsel %vm377, %v338, 0
      %v409 = vsel %vm377, %v339, 0
      %v412 = vsel %vm377, %v340, 0
      %414 = vmatprep.subr.bf16.mxu0 %v370
      %415 = vmatpush1.bf16.msra.mxu0 %v369
      %416 = vmatprep.subr.bf16.mxu0 %v372
      %417 = vmatpush1.bf16.msra.mxu0 %v371
      %418 = vmatprep.subr.bf16.mxu0 0
      %419 = vmatpush1.bf16.msra.mxu0 0
      %420 = vmatprep.subr.bf16.mxu0 0
      %421 = vmatpush1.bf16.msra.mxu0 0
      %422 = vmatprep.subr.bf16.mxu0 0
      %423 = vmatpush1.bf16.msra.mxu0 0
      %424 = vmatprep.subr.bf16.mxu0 0
      %425 = vmatpush1.bf16.msra.mxu0 0
      %426 = vmatprep.subr.bf16.mxu0 0
      %427 = vmatpush1.bf16.msra.mxu0 0
      %428 = vmatprep.subr.bf16.mxu0 0
      %429 = vmatpush1.bf16.msra.mxu0 0
      %430 = vmatprep.subr.bf16.mxu0 0
      %431 = vmatpush1.bf16.msra.mxu0 0
      %432 = vmatprep.subr.bf16.mxu0 0
      %433 = vmatpush1.bf16.msra.mxu0 0
      %434 = vmatprep.subr.bf16.mxu0 0
      %435 = vmatpush1.bf16.msra.mxu0 0
      %436 = vmatprep.subr.bf16.mxu0 0
      %437 = vmatpush1.bf16.msra.mxu0 0
      %438 = vmatprep.subr.bf16.mxu0 0
      %439 = vmatpush1.bf16.msra.mxu0 0
      %440 = vmatprep.subr.bf16.mxu0 0
      %441 = vmatpush1.bf16.msra.mxu0 0
      %442 = vmatprep.subr.bf16.mxu0 0
      %443 = vmatpush1.bf16.msra.mxu0 0
      %444 = vmatprep.subr.bf16.mxu0 0
      %445 = vmatpush1.bf16.msra.mxu0 0
      %446 = vmatprep.mubr.bf16.mxu0 0
      %447 = vmatmul.mubr.bf16.gmra.mrb[0].mxu0 %v379
      %v448 = vpop.f32.mrb[0].mxu0
      %v449 = vadd.f32 %v350, %v448
      %v450 = vpop.f32.mrb[0].mxu0
      %v451 = vadd.f32 %v354, %v450
      %v452 = vpop.f32.mrb[0].mxu0
      %v453 = vadd.f32 %v350, %v452
      %v454 = vpop.f32.mrb[0].mxu0
      %v455 = vadd.f32 %v354, %v454
      %456 = vmatprep.mubr.bf16.mxu0 0
      %457 = vmatmul.mubr.bf16.gmra.mrb[0].mxu0 %v382
      %v458 = vpop.f32.mrb[0].mxu0
      %v459 = vadd.f32 %v350, %v458
      %v460 = vpop.f32.mrb[0].mxu0
      %v461 = vadd.f32 %v354, %v460
      %v462 = vpop.f32.mrb[0].mxu0
      %v463 = vadd.f32 %v350, %v462
      %v464 = vpop.f32.mrb[0].mxu0
      %v465 = vadd.f32 %v354, %v464
      %466 = vmatprep.mubr.bf16.mxu0 0
      %467 = vmatmul.mubr.bf16.gmra.mrb[0].mxu0 %v385
      %v468 = vpop.f32.mrb[0].mxu0
      %v469 = vadd.f32 %v350, %v468
      %v470 = vpop.f32.mrb[0].mxu0
      %v471 = vadd.f32 %v354, %v470
      %v472 = vpop.f32.mrb[0].mxu0
      %v473 = vadd.f32 %v350, %v472
      %v474 = vpop.f32.mrb[0].mxu0
      %v475 = vadd.f32 %v354, %v474
      %476 = vmatprep.mubr.bf16.mxu0 0
      %477 = vmatmul.mubr.bf16.gmra.mrb[0].mxu0 %v388
      %v478 = vpop.f32.mrb[0].mxu0
      %v479 = vadd.f32 %v350, %v478
      %v480 = vpop.f32.mrb[0].mxu0
      %v481 = vadd.f32 %v354, %v480
      %v482 = vpop.f32.mrb[0].mxu0
      %v483 = vadd.f32 %v350, %v482
      %v484 = vpop.f32.mrb[0].mxu0
      %v485 = vadd.f32 %v354, %v484
      %486 = vmatprep.mubr.bf16.mxu0 0
      %487 = vmatmul.mubr.bf16.gmra.mrb[0].mxu0 %v391
      %v488 = vpop.f32.mrb[0].mxu0
      %v489 = vadd.f32 %v350, %v488
      %v490 = vpop.f32.mrb[0].mxu0
      %v491 = vadd.f32 %v354, %v490
      %v492 = vpop.f32.mrb[0].mxu0
      %v493 = vadd.f32 %v350, %v492
      %v494 = vpop.f32.mrb[0].mxu0
      %v495 = vadd.f32 %v354, %v494
      %496 = vmatprep.mubr.bf16.mxu0 0
      %497 = vmatmul.mubr.bf16.gmra.mrb[0].mxu0 %v394
      %v498 = vpop.f32.mrb[0].mxu0
      %v499 = vadd.f32 %v350, %v498
      %v500 = vpop.f32.mrb[0].mxu0
      %v501 = vadd.f32 %v354, %v500
      %v502 = vpop.f32.mrb[0].mxu0
      %v503 = vadd.f32 %v350, %v502
      %v504 = vpop.f32.mrb[0].mxu0
      %v505 = vadd.f32 %v354, %v504
      %506 = vmatprep.mubr.bf16.mxu0 0
      %507 = vmatmul.mubr.bf16.gmra.mrb[0].mxu0 %v397
      %v508 = vpop.f32.mrb[0].mxu0
      %v509 = vadd.f32 %v350, %v508
      %v510 = vpop.f32.mrb[0].mxu0
      %v511 = vadd.f32 %v354, %v510
      %v512 = vpop.f32.mrb[0].mxu0
      %v513 = vadd.f32 %v350, %v512
      %v514 = vpop.f32.mrb[0].mxu0
      %v515 = vadd.f32 %v354, %v514
      %516 = vmatprep.mubr.bf16.mxu0 0
      %517 = vmatmul.mubr.bf16.gmra.mrb[0].mxu0 %v400
      %v518 = vpop.f32.mrb[0].mxu0
      %v519 = vadd.f32 %v350, %v518
      %v520 = vpop.f32.mrb[0].mxu0
      %v521 = vadd.f32 %v354, %v520
      %v522 = vpop.f32.mrb[0].mxu0
      %v523 = vadd.f32 %v350, %v522
      %v524 = vpop.f32.mrb[0].mxu0
      %v525 = vadd.f32 %v354, %v524
      %526 = vmatprep.mubr.bf16.mxu0 0
      %527 = vmatmul.mubr.bf16.gmra.mrb[0].mxu0 %v403
      %v528 = vpop.f32.mrb[0].mxu0
      %v529 = vadd.f32 %v350, %v528
      %v530 = vpop.f32.mrb[0].mxu0
      %v531 = vadd.f32 %v354, %v530
      %v532 = vpop.f32.mrb[0].mxu0
      %v533 = vadd.f32 %v350, %v532
      %v534 = vpop.f32.mrb[0].mxu0
      %v535 = vadd.f32 %v354, %v534
      %536 = vmatprep.mubr.bf16.mxu0 0
      %537 = vmatmul.mubr.bf16.gmra.mrb[0].mxu0 %v406
      %v538 = vpop.f32.mrb[0].mxu0
      %v539 = vadd.f32 %v350, %v538
      %v540 = vpop.f32.mrb[0].mxu0
      %v541 = vadd.f32 %v354, %v540
      %v542 = vpop.f32.mrb[0].mxu0
      %v543 = vadd.f32 %v350, %v542
      %v544 = vpop.f32.mrb[0].mxu0
      %v545 = vadd.f32 %v354, %v544
      %546 = vmatprep.mubr.bf16.mxu0 0
      %547 = vmatmul.mubr.bf16.gmra.mrb[0].mxu0 %v409
      %v548 = vpop.f32.mrb[0].mxu0
      %v549 = vadd.f32 %v350, %v548
      %v550 = vpop.f32.mrb[0].mxu0
      %v551 = vadd.f32 %v354, %v550
      %v552 = vpop.f32.mrb[0].mxu0
      %v553 = vadd.f32 %v350, %v552
      %v554 = vpop.f32.mrb[0].mxu0
      %v555 = vadd.f32 %v354, %v554
      %556 = vmatprep.mubr.bf16.mxu0 0
      %557 = vmatmul.mubr.bf16.gmra.mrb[0].mxu0 %v412
      %v558 = vpop.f32.mrb[0].mxu0
      %v559 = vadd.f32 %v350, %v558
      %v560 = vpop.f32.mrb[0].mxu0
      %v561 = vadd.f32 %v354, %v560
      %v562 = vpop.f32.mrb[0].mxu0
      %v563 = vadd.f32 %v350, %v562
      %v564 = vpop.f32.mrb[0].mxu0
      %v565 = vadd.f32 %v354, %v564
      %566 = vdwg.mxu0
      %v567 = vmax.f32 %v449, 0.0
      %v568 = vmax.f32 %v451, 0.0
      %v569 = vmax.f32 %v453, 0.0
      %v570 = vmax.f32 %v455, 0.0
      %v571 = vmax.f32 %v459, 0.0
      %v572 = vmax.f32 %v461, 0.0
      %v573 = vmax.f32 %v463, 0.0
      %v574 = vmax.f32 %v465, 0.0
      %v575 = vmax.f32 %v469, 0.0
      %v576 = vmax.f32 %v471, 0.0
      %v577 = vmax.f32 %v473, 0.0
      %v578 = vmax.f32 %v475, 0.0
      %v579 = vmax.f32 %v479, 0.0
      %v580 = vmax.f32 %v481, 0.0
      %v581 = vmax.f32 %v483, 0.0
      %v582 = vmax.f32 %v485, 0.0
      %v583 = vmax.f32 %v489, 0.0
      %v584 = vmax.f32 %v491, 0.0
      %v585 = vmax.f32 %v493, 0.0
      %v586 = vmax.f32 %v495, 0.0
      %v587 = vmax.f32 %v499, 0.0
      %v588 = vmax.f32 %v501, 0.0
      %v589 = vmax.f32 %v503, 0.0
      %v590 = vmax.f32 %v505, 0.0
      %v591 = vmax.f32 %v509, 0.0
      %v592 = vmax.f32 %v511, 0.0
      %v593 = vmax.f32 %v513, 0.0
      %v594 = vmax.f32 %v515, 0.0
      %v595 = vmax.f32 %v519, 0.0
      %v596 = vmax.f32 %v521, 0.0
      %v597 = vmax.f32 %v523, 0.0
      %v598 = vmax.f32 %v525, 0.0
      %v599 = vmax.f32 %v529, 0.0
      %v600 = vmax.f32 %v531, 0.0
      %v601 = vmax.f32 %v533, 0.0
      %v602 = vmax.f32 %v535, 0.0
      %v603 = vmax.f32 %v539, 0.0
      %v604 = vmax.f32 %v541, 0.0
      %v605 = vmax.f32 %v543, 0.0
      %v606 = vmax.f32 %v545, 0.0
      %v607 = vmax.f32 %v549, 0.0
      %v608 = vmax.f32 %v551, 0.0
      %v609 = vmax.f32 %v553, 0.0
      %v610 = vmax.f32 %v555, 0.0
      %v611 = vmax.f32 %v559, 0.0
      %v612 = vmax.f32 %v561, 0.0
      %v613 = vmax.f32 %v563, 0.0
      %v614 = vmax.f32 %v565, 0.0
      %v615 = vld [vmem:[%s290] sm:$0xff]
      %v616 = vld [vmem:[%s290 + $0x8] sm:$0xff]
      %v617 = vld [vmem:[%s290 + $0x10] sm:$0xff]
      %v618 = vld [vmem:[%s290 + $0x18] sm:$0xff]
      %v619 = vld [vmem:[%s290 + $0x20] sm:$0xff]
      %v620 = vld [vmem:[%s290 + $0x28] sm:$0xff]
      %v621 = vld [vmem:[%s290 + $0x30] sm:$0xff]
      %v622 = vld [vmem:[%s290 + $0x38] sm:$0xff]
      %v623 = vld [vmem:[%s290 + $0x40] sm:$0xff]
      %v624 = vld [vmem:[%s290 + $0x48] sm:$0xff]
      %v625 = vld [vmem:[%s290 + $0x50] sm:$0xff]
      %v626 = vld [vmem:[%s290 + $0x58] sm:$0xff]
      %v627 = vld [vmem:[%s290 + $0x60] sm:$0xff]
      %v628 = vld [vmem:[%s290 + $0x68] sm:$0xff]
      %v629 = vld [vmem:[%s290 + $0x70] sm:$0xff]
      %v630 = vld [vmem:[%s290 + $0x78] sm:$0xff]
      %v631 = vld [vmem:[%s290 + $0x80] sm:$0xff]
      %v632 = vld [vmem:[%s290 + $0x88] sm:$0xff]
      %v633 = vld [vmem:[%s290 + $0x90] sm:$0xff]
      %v634 = vld [vmem:[%s290 + $0x98] sm:$0xff]
      %v635 = vld [vmem:[%s290 + $0xa0] sm:$0xff]
      %v636 = vld [vmem:[%s290 + $0xa8] sm:$0xff]
      %v637 = vld [vmem:[%s290 + $0xb0] sm:$0xff]
      %v638 = vld [vmem:[%s290 + $0xb8] sm:$0xff]
      %v639 = vlaneseq
      %v640 = vand.u32 %v639, 127
      %v641 = vadd.s32 %v640, 128
      %v642 = vshra.s32 %v640, 5
      %v643 = vshra.s32 %v641, 5
      %vm644 = vcmp.lt.s32.totalorder %v642, 2
      %vm645 = vcmp.lt.s32.totalorder %v643, 2
      %v646 = vadd.s32 %v615, 2
      %v647 = vadd.s32 %v616, 2
      %v648 = vadd.s32 %v617, 2
      %v649 = vadd.s32 %v618, 2
      %v650 = vadd.s32 %v619, 2
      %v651 = vadd.s32 %v620, 2
      %v652 = vadd.s32 %v621, 2
      %v653 = vadd.s32 %v622, 2
      %v654 = vadd.s32 %v623, 2
      %v655 = vadd.s32 %v624, 2
      %v656 = vadd.s32 %v625, 2
      %v657 = vadd.s32 %v626, 2
      %v658 = vadd.s32 %v627, 2
      %v659 = vadd.s32 %v628, 2
      %v660 = vadd.s32 %v629, 2
      %v661 = vadd.s32 %v630, 2
      %v662 = vadd.s32 %v631, 2
      %v663 = vadd.s32 %v632, 2
      %v664 = vadd.s32 %v633, 2
      %v665 = vadd.s32 %v634, 2
      %v666 = vadd.s32 %v635, 2
      %v667 = vadd.s32 %v636, 2
      %v668 = vadd.s32 %v637, 2
      %v669 = vadd.s32 %v638, 2
      %670 = vset.pattern.permute.xlu0 0
      %671 = vperm.xlu0 %670, %v646
      %v672 = vpop.permute.xlu0 %671
      %673 = vset.pattern.permute.xlu0 0
      %674 = vperm.xlu0 %673, %v647
      %v675 = vpop.permute.xlu0 %674
      %676 = vset.pattern.permute.xlu0 0
      %677 = vperm.xlu0 %676, %v648
      %v678 = vpop.permute.xlu0 %677
      %679 = vset.pattern.permute.xlu0 0
      %680 = vperm.xlu0 %679, %v649
      %v681 = vpop.permute.xlu0 %680
      %682 = vset.pattern.permute.xlu0 0
      %683 = vperm.xlu0 %682, %v650
      %v684 = vpop.permute.xlu0 %683
      %685 = vset.pattern.permute.xlu0 0
      %686 = vperm.xlu0 %685, %v651
      %v687 = vpop.permute.xlu0 %686
      %688 = vset.pattern.permute.xlu0 0
      %689 = vperm.xlu0 %688, %v652
      %v690 = vpop.permute.xlu0 %689
      %691 = vset.pattern.permute.xlu0 0
      %692 = vperm.xlu0 %691, %v653
      %v693 = vpop.permute.xlu0 %692
      %694 = vset.pattern.permute.xlu0 0
      %695 = vperm.xlu0 %694, %v654
      %v696 = vpop.permute.xlu0 %695
      %697 = vset.pattern.permute.xlu0 0
      %698 = vperm.xlu0 %697, %v655
      %v699 = vpop.permute.xlu0 %698
      %700 = vset.pattern.permute.xlu0 0
      %701 = vperm.xlu0 %700, %v656
      %v702 = vpop.permute.xlu0 %701
      %703 = vset.pattern.permute.xlu0 0
      %704 = vperm.xlu0 %703, %v657
      %v705 = vpop.permute.xlu0 %704
      %706 = vset.pattern.permute.xlu0 0
      %707 = vperm.xlu0 %706, %v658
      %v708 = vpop.permute.xlu0 %707
      %709 = vset.pattern.permute.xlu0 0
      %710 = vperm.xlu0 %709, %v659
      %v711 = vpop.permute.xlu0 %710
      %712 = vset.pattern.permute.xlu0 0
      %713 = vperm.xlu0 %712, %v660
      %v714 = vpop.permute.xlu0 %713
      %715 = vset.pattern.permute.xlu0 0
      %716 = vperm.xlu0 %715, %v661
      %v717 = vpop.permute.xlu0 %716
      %718 = vset.pattern.permute.xlu0 0
      %719 = vperm.xlu0 %718, %v662
      %v720 = vpop.permute.xlu0 %719
      %721 = vset.pattern.permute.xlu0 0
      %722 = vperm.xlu0 %721, %v663
      %v723 = vpop.permute.xlu0 %722
      %724 = vset.pattern.permute.xlu0 0
      %725 = vperm.xlu0 %724, %v664
      %v726 = vpop.permute.xlu0 %725
      %727 = vset.pattern.permute.xlu0 0
      %728 = vperm.xlu0 %727, %v665
      %v729 = vpop.permute.xlu0 %728
      %730 = vset.pattern.permute.xlu0 0
      %731 = vperm.xlu0 %730, %v666
      %v732 = vpop.permute.xlu0 %731
      %733 = vset.pattern.permute.xlu0 0
      %734 = vperm.xlu0 %733, %v667
      %v735 = vpop.permute.xlu0 %734
      %736 = vset.pattern.permute.xlu0 0
      %737 = vperm.xlu0 %736, %v668
      %v738 = vpop.permute.xlu0 %737
      %739 = vset.pattern.permute.xlu0 0
      %740 = vperm.xlu0 %739, %v669
      %v741 = vpop.permute.xlu0 %740
      %vm742 = vcmp.eq.s32.totalorder %v642, %v672
      %vm743 = vcmp.eq.s32.totalorder %v643, %v672
      %vm744 = vcmp.eq.s32.totalorder %v642, %v675
      %vm745 = vcmp.eq.s32.totalorder %v643, %v675
      %vm746 = vcmp.eq.s32.totalorder %v642, %v678
      %vm747 = vcmp.eq.s32.totalorder %v643, %v678
      %vm748 = vcmp.eq.s32.totalorder %v642, %v681
      %vm749 = vcmp.eq.s32.totalorder %v643, %v681
      %vm750 = vcmp.eq.s32.totalorder %v642, %v684
      %vm751 = vcmp.eq.s32.totalorder %v643, %v684
      %vm752 = vcmp.eq.s32.totalorder %v642, %v687
      %vm753 = vcmp.eq.s32.totalorder %v643, %v687
      %vm754 = vcmp.eq.s32.totalorder %v642, %v690
      %vm755 = vcmp.eq.s32.totalorder %v643, %v690
      %vm756 = vcmp.eq.s32.totalorder %v642, %v693
      %vm757 = vcmp.eq.s32.totalorder %v643, %v693
      %vm758 = vcmp.eq.s32.totalorder %v642, %v696
      %vm759 = vcmp.eq.s32.totalorder %v643, %v696
      %vm760 = vcmp.eq.s32.totalorder %v642, %v699
      %vm761 = vcmp.eq.s32.totalorder %v643, %v699
      %vm762 = vcmp.eq.s32.totalorder %v642, %v702
      %vm763 = vcmp.eq.s32.totalorder %v643, %v702
      %vm764 = vcmp.eq.s32.totalorder %v642, %v705
      %vm765 = vcmp.eq.s32.totalorder %v643, %v705
      %vm766 = vcmp.eq.s32.totalorder %v642, %v708
      %vm767 = vcmp.eq.s32.totalorder %v643, %v708
      %vm768 = vcmp.eq.s32.totalorder %v642, %v711
      %vm769 = vcmp.eq.s32.totalorder %v643, %v711
      %vm770 = vcmp.eq.s32.totalorder %v642, %v714
      %vm771 = vcmp.eq.s32.totalorder %v643, %v714
      %vm772 = vcmp.eq.s32.totalorder %v642, %v717
      %vm773 = vcmp.eq.s32.totalorder %v643, %v717
      %vm774 = vcmp.eq.s32.totalorder %v642, %v720
      %vm775 = vcmp.eq.s32.totalorder %v643, %v720
      %vm776 = vcmp.eq.s32.totalorder %v642, %v723
      %vm777 = vcmp.eq.s32.totalorder %v643, %v723
      %vm778 = vcmp.eq.s32.totalorder %v642, %v726
      %vm779 = vcmp.eq.s32.totalorder %v643, %v726
      %vm780 = vcmp.eq.s32.totalorder %v642, %v729
      %vm781 = vcmp.eq.s32.totalorder %v643, %v729
      %vm782 = vcmp.eq.s32.totalorder %v642, %v732
      %vm783 = vcmp.eq.s32.totalorder %v643, %v732
      %vm784 = vcmp.eq.s32.totalorder %v642, %v735
      %vm785 = vcmp.eq.s32.totalorder %v643, %v735
      %vm786 = vcmp.eq.s32.totalorder %v642, %v738
      %vm787 = vcmp.eq.s32.totalorder %v643, %v738
      %vm788 = vcmp.eq.s32.totalorder %v642, %v741
      %vm789 = vcmp.eq.s32.totalorder %v643, %v741
      %v790 = vsel %vm644, 1, 0
      %v791 = vsel %vm645, 1, 0
      %vm792 = vcmp.eq.s32.totalorder %v790, 1
      %vm793 = vcmp.eq.s32.totalorder %v791, 1
      %vm794 = vmor %vm792, %vm742
      %vm795 = vmor %vm793, %vm743
      %vm796 = vmor %vm792, %vm744
      %vm797 = vmor %vm793, %vm745
      %vm798 = vmor %vm792, %vm746
      %vm799 = vmor %vm793, %vm747
      %vm800 = vmor %vm792, %vm748
      %vm801 = vmor %vm793, %vm749
      %vm802 = vmor %vm792, %vm750
      %vm803 = vmor %vm793, %vm751
      %vm804 = vmor %vm792, %vm752
      %vm805 = vmor %vm793, %vm753
      %vm806 = vmor %vm792, %vm754
      %vm807 = vmor %vm793, %vm755
      %vm808 = vmor %vm792, %vm756
      %vm809 = vmor %vm793, %vm757
      %vm810 = vmor %vm792, %vm758
      %vm811 = vmor %vm793, %vm759
      %vm812 = vmor %vm792, %vm760
      %vm813 = vmor %vm793, %vm761
      %vm814 = vmor %vm792, %vm762
      %vm815 = vmor %vm793, %vm763
      %vm816 = vmor %vm792, %vm764
      %vm817 = vmor %vm793, %vm765
      %vm818 = vmor %vm792, %vm766
      %vm819 = vmor %vm793, %vm767
      %vm820 = vmor %vm792, %vm768
      %vm821 = vmor %vm793, %vm769
      %vm822 = vmor %vm792, %vm770
      %vm823 = vmor %vm793, %vm771
      %vm824 = vmor %vm792, %vm772
      %vm825 = vmor %vm793, %vm773
      %vm826 = vmor %vm792, %vm774
      %vm827 = vmor %vm793, %vm775
      %vm828 = vmor %vm792, %vm776
      %vm829 = vmor %vm793, %vm777
      %vm830 = vmor %vm792, %vm778
      %vm831 = vmor %vm793, %vm779
      %vm832 = vmor %vm792, %vm780
      %vm833 = vmor %vm793, %vm781
      %vm834 = vmor %vm792, %vm782
      %vm835 = vmor %vm793, %vm783
      %vm836 = vmor %vm792, %vm784
      %vm837 = vmor %vm793, %vm785
      %vm838 = vmor %vm792, %vm786
      %vm839 = vmor %vm793, %vm787
      %vm840 = vmor %vm792, %vm788
      %vm841 = vmor %vm793, %vm789
      %v842 = vpack.c.bf16 %v569, %v567
      %v843 = vpack.c.bf16 %v570, %v568
      %v844 = vpack.c.bf16 %v573, %v571
      %v845 = vpack.c.bf16 %v574, %v572
      %v846 = vpack.c.bf16 %v577, %v575
      %v847 = vpack.c.bf16 %v578, %v576
      %v848 = vpack.c.bf16 %v581, %v579
      %v849 = vpack.c.bf16 %v582, %v580
      %v850 = vpack.c.bf16 %v585, %v583
      %v851 = vpack.c.bf16 %v586, %v584
      %v852 = vpack.c.bf16 %v589, %v587
      %v853 = vpack.c.bf16 %v590, %v588
      %v854 = vpack.c.bf16 %v593, %v591
      %v855 = vpack.c.bf16 %v594, %v592
      %v856 = vpack.c.bf16 %v597, %v595
      %v857 = vpack.c.bf16 %v598, %v596
      %v858 = vpack.c.bf16 %v601, %v599
      %v859 = vpack.c.bf16 %v602, %v600
      %v860 = vpack.c.bf16 %v605, %v603
      %v861 = vpack.c.bf16 %v606, %v604
      %v862 = vpack.c.bf16 %v609, %v607
      %v863 = vpack.c.bf16 %v610, %v608
      %v864 = vpack.c.bf16 %v613, %v611
      %v865 = vpack.c.bf16 %v614, %v612
      %vm866 = vmpackc.low %vm796, %vm794
      %vm867 = vmpackc.low %vm797, %vm795
      %vm868 = vmpackc.low %vm800, %vm798
      %vm869 = vmpackc.low %vm801, %vm799
      %vm870 = vmpackc.low %vm804, %vm802
      %vm871 = vmpackc.low %vm805, %vm803
      %vm872 = vmpackc.low %vm808, %vm806
      %vm873 = vmpackc.low %vm809, %vm807
      %vm874 = vmpackc.low %vm812, %vm810
      %vm875 = vmpackc.low %vm813, %vm811
      %vm876 = vmpackc.low %vm816, %vm814
      %vm877 = vmpackc.low %vm817, %vm815
      %vm878 = vmpackc.low %vm820, %vm818
      %vm879 = vmpackc.low %vm821, %vm819
      %vm880 = vmpackc.low %vm824, %vm822
      %vm881 = vmpackc.low %vm825, %vm823
      %vm882 = vmpackc.low %vm828, %vm826
      %vm883 = vmpackc.low %vm829, %vm827
      %vm884 = vmpackc.low %vm832, %vm830
      %vm885 = vmpackc.low %vm833, %vm831
      %vm886 = vmpackc.low %vm836, %vm834
      %vm887 = vmpackc.low %vm837, %vm835
      %vm888 = vmpackc.low %vm840, %vm838
      %vm889 = vmpackc.low %vm841, %vm839
      %v890 = vsel %vm866, %v842, 0
      %v891 = vsel %vm867, %v843, 0
      %v892 = vsel %vm868, %v844, 0
      %v893 = vsel %vm869, %v845, 0
      %v894 = vsel %vm870, %v846, 0
      %v895 = vsel %vm871, %v847, 0
      %v896 = vsel %vm872, %v848, 0
      %v897 = vsel %vm873, %v849, 0
      %v898 = vsel %vm874, %v850, 0
      %v899 = vsel %vm875, %v851, 0
      %v900 = vsel %vm876, %v852, 0
      %v901 = vsel %vm877, %v853, 0
      %v902 = vsel %vm878, %v854, 0
      %v903 = vsel %vm879, %v855, 0
      %v904 = vsel %vm880, %v856, 0
      %v905 = vsel %vm881, %v857, 0
      %v906 = vsel %vm882, %v858, 0
      %v907 = vsel %vm883, %v859, 0
      %v908 = vsel %vm884, %v860, 0
      %v909 = vsel %vm885, %v861, 0
      %v910 = vsel %vm886, %v862, 0
      %v911 = vsel %vm887, %v863, 0
      %v912 = vsel %vm888, %v864, 0
      %v913 = vsel %vm889, %v865, 0
      %v914 = vld [vmem:[%s4] sm:$0xf]
      %v915 = vld [vmem:[%s4 + $0x4] sm:$0xf]
      %v916 = vld [vmem:[%s4 + $0x8] sm:$0xf]
      %v917 = vld [vmem:[%s4 + $0xc] sm:$0xf]
      %v918 = vld [vmem:[%s4 + $0x10] sm:$0xf]
      %v919 = vld [vmem:[%s4 + $0x14] sm:$0xf]
      %v920 = vld [vmem:[%s4 + $0x18] sm:$0xf]
      %v921 = vld [vmem:[%s4 + $0x1c] sm:$0xf]
      %v922 = vld [vmem:[%s4 + $0x20] sm:$0xf]
      %v923 = vld [vmem:[%s4 + $0x24] sm:$0xf]
      %v924 = vld [vmem:[%s4 + $0x28] sm:$0xf]
      %v925 = vld [vmem:[%s4 + $0x2c] sm:$0xf]
      %v926 = vld [vmem:[%s4 + $0x30] sm:$0xf]
      %v927 = vld [vmem:[%s4 + $0x34] sm:$0xf]
      %v928 = vld [vmem:[%s4 + $0x38] sm:$0xf]
      %v929 = vld [vmem:[%s4 + $0x3c] sm:$0xf]
      %v930 = vld [vmem:[%s4 + $0x40] sm:$0xf]
      %v931 = vld [vmem:[%s4 + $0x44] sm:$0xf]
      %v932 = vld [vmem:[%s4 + $0x48] sm:$0xf]
      %v933 = vld [vmem:[%s4 + $0x4c] sm:$0xf]
      %v934 = vld [vmem:[%s4 + $0x50] sm:$0xf]
      %v935 = vld [vmem:[%s4 + $0x54] sm:$0xf]
      %v936 = vld [vmem:[%s4 + $0x58] sm:$0xf]
      %v937 = vld [vmem:[%s4 + $0x5c] sm:$0xf]
      %v938 = vld [vmem:[%s5] sm:$0x1]
      %v940 = vlaneseq
      %v941 = vshrl.u32 %v940, 7
      %v942 = vsub.s32 0, %v941
      %v943 = vrot.slane %v938, %v942
      %v969 = vunpack.c.l.b16 %v914
      %v970 = vunpack.c.l.b16 %v915
      %v971 = vunpack.c.l.b16 %v916
      %v972 = vunpack.c.l.b16 %v917
      %v973 = vunpack.c.l.b16 %v918
      %v974 = vunpack.c.l.b16 %v919
      %v975 = vunpack.c.l.b16 %v920
      %v976 = vunpack.c.l.b16 %v921
      %v977 = vunpack.c.l.b16 %v922
      %v978 = vunpack.c.l.b16 %v923
      %v979 = vunpack.c.l.b16 %v924
      %v980 = vunpack.c.l.b16 %v925
      %v981 = vunpack.c.l.b16 %v926
      %v982 = vunpack.c.l.b16 %v927
      %v983 = vunpack.c.l.b16 %v928
      %v984 = vunpack.c.l.b16 %v929
      %v985 = vunpack.c.l.b16 %v930
      %v986 = vunpack.c.l.b16 %v931
      %v987 = vunpack.c.l.b16 %v932
      %v988 = vunpack.c.l.b16 %v933
      %v989 = vunpack.c.l.b16 %v934
      %v990 = vunpack.c.l.b16 %v935
      %v991 = vunpack.c.l.b16 %v936
      %v992 = vunpack.c.l.b16 %v937
      %v993 = vpack.c.b16 %v970, %v969
      %v994 = vpack.c.b16 %v972, %v971
      %v995 = vpack.c.b16 %v974, %v973
      %v996 = vpack.c.b16 %v976, %v975
      %v997 = vpack.c.b16 %v978, %v977
      %v998 = vpack.c.b16 %v980, %v979
      %v999 = vpack.c.b16 %v982, %v981
      %v1000 = vpack.c.b16 %v984, %v983
      %v1001 = vpack.c.b16 %v986, %v985
      %v1002 = vpack.c.b16 %v988, %v987
      %v1003 = vpack.c.b16 %v990, %v989
      %v1004 = vpack.c.b16 %v992, %v991
      %vm1017 = vcmask 523264
      %v1019 = vsel %vm1017, %v891, 0
      %v1022 = vsel %vm1017, %v893, 0
      %v1025 = vsel %vm1017, %v895, 0
      %v1028 = vsel %vm1017, %v897, 0
      %v1031 = vsel %vm1017, %v899, 0
      %v1034 = vsel %vm1017, %v901, 0
      %v1037 = vsel %vm1017, %v903, 0
      %v1040 = vsel %vm1017, %v905, 0
      %v1043 = vsel %vm1017, %v907, 0
      %v1046 = vsel %vm1017, %v909, 0
      %v1049 = vsel %vm1017, %v911, 0
      %v1052 = vsel %vm1017, %v913, 0
      %1054 = vmatprep.subr.bf16.mxu0 0
      %1055 = vmatpush1.bf16.msra.mxu0 %v993
      %1056 = vmatprep.subr.bf16.mxu0 0
      %1057 = vmatpush1.bf16.msra.mxu0 %v994
      %1058 = vmatprep.subr.bf16.mxu0 0
      %1059 = vmatpush1.bf16.msra.mxu0 %v995
      %1060 = vmatprep.subr.bf16.mxu0 0
      %1061 = vmatpush1.bf16.msra.mxu0 %v996
      %1062 = vmatprep.subr.bf16.mxu0 0
      %1063 = vmatpush1.bf16.msra.mxu0 %v997
      %1064 = vmatprep.subr.bf16.mxu0 0
      %1065 = vmatpush1.bf16.msra.mxu0 %v998
      %1066 = vmatprep.subr.bf16.mxu0 0
      %1067 = vmatpush1.bf16.msra.mxu0 %v999
      %1068 = vmatprep.subr.bf16.mxu0 0
      %1069 = vmatpush1.bf16.msra.mxu0 %v1000
      %1070 = vmatprep.subr.bf16.mxu0 0
      %1071 = vmatpush1.bf16.msra.mxu0 %v1001
      %1072 = vmatprep.subr.bf16.mxu0 0
      %1073 = vmatpush1.bf16.msra.mxu0 %v1002
      %1074 = vmatprep.subr.bf16.mxu0 0
      %1075 = vmatpush1.bf16.msra.mxu0 %v1003
      %1076 = vmatprep.subr.bf16.mxu0 0
      %1077 = vmatpush1.bf16.msra.mxu0 %v1004
      %1078 = vmatprep.subr.bf16.mxu0 0
      %1079 = vmatpush1.bf16.msra.mxu0 0
      %1080 = vmatprep.subr.bf16.mxu0 0
      %1081 = vmatpush1.bf16.msra.mxu0 0
      %1082 = vmatprep.subr.bf16.mxu0 0
      %1083 = vmatpush1.bf16.msra.mxu0 0
      %1084 = vmatprep.subr.bf16.mxu0 0
      %1085 = vmatpush1.bf16.msra.mxu0 0
      %1086 = vmatprep.mubr.bf16.mxu0 %v1019
      %1087 = vmatmul.mubr.bf16.gmra.mrb[0].mxu0 %v890
      %v1088 = vpop.f32.mrb[0].mxu0
      %v1089 = vadd.f32 %v943, %v1088
      %v1090 = vpop.f32.mrb[0].mxu0
      %v1091 = vpop.f32.mrb[0].mxu0
      %v1092 = vadd.f32 %v943, %v1091
      %v1093 = vpop.f32.mrb[0].mxu0
      %1094 = vmatprep.mubr.bf16.mxu0 %v1022
      %1095 = vmatmul.mubr.bf16.gmra.mrb[0].mxu0 %v892
      %v1096 = vpop.f32.mrb[0].mxu0
      %v1097 = vadd.f32 %v943, %v1096
      %v1098 = vpop.f32.mrb[0].mxu0
      %v1099 = vpop.f32.mrb[0].mxu0
      %v1100 = vadd.f32 %v943, %v1099
      %v1101 = vpop.f32.mrb[0].mxu0
      %1102 = vmatprep.mubr.bf16.mxu0 %v1025
      %1103 = vmatmul.mubr.bf16.gmra.mrb[0].mxu0 %v894
      %v1104 = vpop.f32.mrb[0].mxu0
      %v1105 = vadd.f32 %v943, %v1104
      %v1106 = vpop.f32.mrb[0].mxu0
      %v1107 = vpop.f32.mrb[0].mxu0
      %v1108 = vadd.f32 %v943, %v1107
      %v1109 = vpop.f32.mrb[0].mxu0
      %1110 = vmatprep.mubr.bf16.mxu0 %v1028
      %1111 = vmatmul.mubr.bf16.gmra.mrb[0].mxu0 %v896
      %v1112 = vpop.f32.mrb[0].mxu0
      %v1113 = vadd.f32 %v943, %v1112
      %v1114 = vpop.f32.mrb[0].mxu0
      %v1115 = vpop.f32.mrb[0].mxu0
      %v1116 = vadd.f32 %v943, %v1115
      %v1117 = vpop.f32.mrb[0].mxu0
      %1118 = vmatprep.mubr.bf16.mxu0 %v1031
      %1119 = vmatmul.mubr.bf16.gmra.mrb[0].mxu0 %v898
      %v1120 = vpop.f32.mrb[0].mxu0
      %v1121 = vadd.f32 %v943, %v1120
      %v1122 = vpop.f32.mrb[0].mxu0
      %v1123 = vpop.f32.mrb[0].mxu0
      %v1124 = vadd.f32 %v943, %v1123
      %v1125 = vpop.f32.mrb[0].mxu0
      %1126 = vmatprep.mubr.bf16.mxu0 %v1034
      %1127 = vmatmul.mubr.bf16.gmra.mrb[0].mxu0 %v900
      %v1128 = vpop.f32.mrb[0].mxu0
      %v1129 = vadd.f32 %v943, %v1128
      %v1130 = vpop.f32.mrb[0].mxu0
      %v1131 = vpop.f32.mrb[0].mxu0
      %v1132 = vadd.f32 %v943, %v1131
      %v1133 = vpop.f32.mrb[0].mxu0
      %1134 = vmatprep.mubr.bf16.mxu0 %v1037
      %1135 = vmatmul.mubr.bf16.gmra.mrb[0].mxu0 %v902
      %v1136 = vpop.f32.mrb[0].mxu0
      %v1137 = vadd.f32 %v943, %v1136
      %v1138 = vpop.f32.mrb[0].mxu0
      %v1139 = vpop.f32.mrb[0].mxu0
      %v1140 = vadd.f32 %v943, %v1139
      %v1141 = vpop.f32.mrb[0].mxu0
      %1142 = vmatprep.mubr.bf16.mxu0 %v1040
      %1143 = vmatmul.mubr.bf16.gmra.mrb[0].mxu0 %v904
      %v1144 = vpop.f32.mrb[0].mxu0
      %v1145 = vadd.f32 %v943, %v1144
      %v1146 = vpop.f32.mrb[0].mxu0
      %v1147 = vpop.f32.mrb[0].mxu0
      %v1148 = vadd.f32 %v943, %v1147
      %v1149 = vpop.f32.mrb[0].mxu0
      %1150 = vmatprep.mubr.bf16.mxu0 %v1043
      %1151 = vmatmul.mubr.bf16.gmra.mrb[0].mxu0 %v906
      %v1152 = vpop.f32.mrb[0].mxu0
      %v1153 = vadd.f32 %v943, %v1152
      %v1154 = vpop.f32.mrb[0].mxu0
      %v1155 = vpop.f32.mrb[0].mxu0
      %v1156 = vadd.f32 %v943, %v1155
      %v1157 = vpop.f32.mrb[0].mxu0
      %1158 = vmatprep.mubr.bf16.mxu0 %v1046
      %1159 = vmatmul.mubr.bf16.gmra.mrb[0].mxu0 %v908
      %v1160 = vpop.f32.mrb[0].mxu0
      %v1161 = vadd.f32 %v943, %v1160
      %v1162 = vpop.f32.mrb[0].mxu0
      %v1163 = vpop.f32.mrb[0].mxu0
      %v1164 = vadd.f32 %v943, %v1163
      %v1165 = vpop.f32.mrb[0].mxu0
      %1166 = vmatprep.mubr.bf16.mxu0 %v1049
      %1167 = vmatmul.mubr.bf16.gmra.mrb[0].mxu0 %v910
      %v1168 = vpop.f32.mrb[0].mxu0
      %v1169 = vadd.f32 %v943, %v1168
      %v1170 = vpop.f32.mrb[0].mxu0
      %v1171 = vpop.f32.mrb[0].mxu0
      %v1172 = vadd.f32 %v943, %v1171
      %v1173 = vpop.f32.mrb[0].mxu0
      %1174 = vmatprep.mubr.bf16.mxu0 %v1052
      %1175 = vmatmul.mubr.bf16.gmra.mrb[0].mxu0 %v912
      %v1176 = vpop.f32.mrb[0].mxu0
      %v1177 = vadd.f32 %v943, %v1176
      %v1178 = vpop.f32.mrb[0].mxu0
      %v1179 = vpop.f32.mrb[0].mxu0
      %v1180 = vadd.f32 %v943, %v1179
      %v1181 = vpop.f32.mrb[0].mxu0
      %1182 = vdwg.mxu0
      %v1183 = vmax.f32 %v1089, 0.0
      %v1184 = vmax.f32 %v1092, 0.0
      %v1185 = vmax.f32 %v1097, 0.0
      %v1186 = vmax.f32 %v1100, 0.0
      %v1187 = vmax.f32 %v1105, 0.0
      %v1188 = vmax.f32 %v1108, 0.0
      %v1189 = vmax.f32 %v1113, 0.0
      %v1190 = vmax.f32 %v1116, 0.0
      %v1191 = vmax.f32 %v1121, 0.0
      %v1192 = vmax.f32 %v1124, 0.0
      %v1193 = vmax.f32 %v1129, 0.0
      %v1194 = vmax.f32 %v1132, 0.0
      %v1195 = vmax.f32 %v1137, 0.0
      %v1196 = vmax.f32 %v1140, 0.0
      %v1197 = vmax.f32 %v1145, 0.0
      %v1198 = vmax.f32 %v1148, 0.0
      %v1199 = vmax.f32 %v1153, 0.0
      %v1200 = vmax.f32 %v1156, 0.0
      %v1201 = vmax.f32 %v1161, 0.0
      %v1202 = vmax.f32 %v1164, 0.0
      %v1203 = vmax.f32 %v1169, 0.0
      %v1204 = vmax.f32 %v1172, 0.0
      %v1205 = vmax.f32 %v1177, 0.0
      %v1206 = vmax.f32 %v1180, 0.0
      %v1207 = vpack.c.bf16 %v1184, %v1183
      %v1208 = vpack.c.bf16 %v1186, %v1185
      %v1209 = vpack.c.bf16 %v1188, %v1187
      %v1210 = vpack.c.bf16 %v1190, %v1189
      %v1211 = vpack.c.bf16 %v1192, %v1191
      %v1212 = vpack.c.bf16 %v1194, %v1193
      %v1213 = vpack.c.bf16 %v1196, %v1195
      %v1214 = vpack.c.bf16 %v1198, %v1197
      %v1215 = vpack.c.bf16 %v1200, %v1199
      %v1216 = vpack.c.bf16 %v1202, %v1201
      %v1217 = vpack.c.bf16 %v1204, %v1203
      %v1218 = vpack.c.bf16 %v1206, %v1205
      %v1219 = vld [vmem:[%s6] sm:$0xf]
      %v1220 = vld [vmem:[%s6 + $0x4] sm:$0xf]
      %v1221 = vld [vmem:[%s6 + $0x8] sm:$0xf]
      %v1222 = vld [vmem:[%s6 + $0xc] sm:$0xf]
      %v1227 = vunpack.c.l.b16 %v1219
      %v1228 = vunpack.c.l.b16 %v1220
      %v1229 = vunpack.c.l.b16 %v1221
      %v1230 = vunpack.c.l.b16 %v1222
      %v1231 = vpack.c.b16 %v1228, %v1227
      %v1232 = vpack.c.b16 %v1230, %v1229
      %v1236 = vsel %vm377, %v1207, 0
      %v1239 = vsel %vm377, %v1208, 0
      %v1242 = vsel %vm377, %v1209, 0
      %v1245 = vsel %vm377, %v1210, 0
      %v1248 = vsel %vm377, %v1211, 0
      %v1251 = vsel %vm377, %v1212, 0
      %v1254 = vsel %vm377, %v1213, 0
      %v1257 = vsel %vm377, %v1214, 0
      %v1260 = vsel %vm377, %v1215, 0
      %v1263 = vsel %vm377, %v1216, 0
      %v1266 = vsel %vm377, %v1217, 0
      %v1269 = vsel %vm377, %v1218, 0
      %1271 = vmatprep.subr.bf16.mxu0 0
      %1272 = vmatpush1.bf16.msra.mxu0 %v1231
      %1273 = vmatprep.subr.bf16.mxu0 0
      %1274 = vmatpush1.bf16.msra.mxu0 %v1232
      %1275 = vmatprep.subr.bf16.mxu0 0
      %1276 = vmatpush1.bf16.msra.mxu0 0
      %1277 = vmatprep.subr.bf16.mxu0 0
      %1278 = vmatpush1.bf16.msra.mxu0 0
      %1279 = vmatprep.subr.bf16.mxu0 0
      %1280 = vmatpush1.bf16.msra.mxu0 0
      %1281 = vmatprep.subr.bf16.mxu0 0
      %1282 = vmatpush1.bf16.msra.mxu0 0
      %1283 = vmatprep.subr.bf16.mxu0 0
      %1284 = vmatpush1.bf16.msra.mxu0 0
      %1285 = vmatprep.subr.bf16.mxu0 0
      %1286 = vmatpush1.bf16.msra.mxu0 0
      %1287 = vmatprep.subr.bf16.mxu0 0
      %1288 = vmatpush1.bf16.msra.mxu0 0
      %1289 = vmatprep.subr.bf16.mxu0 0
      %1290 = vmatpush1.bf16.msra.mxu0 0
      %1291 = vmatprep.subr.bf16.mxu0 0
      %1292 = vmatpush1.bf16.msra.mxu0 0
      %1293 = vmatprep.subr.bf16.mxu0 0
      %1294 = vmatpush1.bf16.msra.mxu0 0
      %1295 = vmatprep.subr.bf16.mxu0 0
      %1296 = vmatpush1.bf16.msra.mxu0 0
      %1297 = vmatprep.subr.bf16.mxu0 0
      %1298 = vmatpush1.bf16.msra.mxu0 0
      %1299 = vmatprep.subr.bf16.mxu0 0
      %1300 = vmatpush1.bf16.msra.mxu0 0
      %1301 = vmatprep.subr.bf16.mxu0 0
      %1302 = vmatpush1.bf16.msra.mxu0 0
      %1303 = vmatprep.mubr.bf16.mxu0 0
      %1304 = vmatmul.mubr.bf16.gmra.mrb[0].mxu0 %v1236
      %v1305 = vpop.f32.mrb[0].mxu0
      %v1306 = vadd.f32 0.0, %v1305
      %v1307 = vpop.f32.mrb[0].mxu0
      %v1308 = vpop.f32.mrb[0].mxu0
      %v1309 = vadd.f32 0.0, %v1308
      %v1310 = vpop.f32.mrb[0].mxu0
      %1311 = vmatprep.mubr.bf16.mxu0 0
      %1312 = vmatmul.mubr.bf16.gmra.mrb[0].mxu0 %v1239
      %v1313 = vpop.f32.mrb[0].mxu0
      %v1314 = vadd.f32 0.0, %v1313
      %v1315 = vpop.f32.mrb[0].mxu0
      %v1316 = vpop.f32.mrb[0].mxu0
      %v1317 = vadd.f32 0.0, %v1316
      %v1318 = vpop.f32.mrb[0].mxu0
      %1319 = vmatprep.mubr.bf16.mxu0 0
      %1320 = vmatmul.mubr.bf16.gmra.mrb[0].mxu0 %v1242
      %v1321 = vpop.f32.mrb[0].mxu0
      %v1322 = vadd.f32 0.0, %v1321
      %v1323 = vpop.f32.mrb[0].mxu0
      %v1324 = vpop.f32.mrb[0].mxu0
      %v1325 = vadd.f32 0.0, %v1324
      %v1326 = vpop.f32.mrb[0].mxu0
      %1327 = vmatprep.mubr.bf16.mxu0 0
      %1328 = vmatmul.mubr.bf16.gmra.mrb[0].mxu0 %v1245
      %v1329 = vpop.f32.mrb[0].mxu0
      %v1330 = vadd.f32 0.0, %v1329
      %v1331 = vpop.f32.mrb[0].mxu0
      %v1332 = vpop.f32.mrb[0].mxu0
      %v1333 = vadd.f32 0.0, %v1332
      %v1334 = vpop.f32.mrb[0].mxu0
      %1335 = vmatprep.mubr.bf16.mxu0 0
      %1336 = vmatmul.mubr.bf16.gmra.mrb[0].mxu0 %v1248
      %v1337 = vpop.f32.mrb[0].mxu0
      %v1338 = vadd.f32 0.0, %v1337
      %v1339 = vpop.f32.mrb[0].mxu0
      %v1340 = vpop.f32.mrb[0].mxu0
      %v1341 = vadd.f32 0.0, %v1340
      %v1342 = vpop.f32.mrb[0].mxu0
      %1343 = vmatprep.mubr.bf16.mxu0 0
      %1344 = vmatmul.mubr.bf16.gmra.mrb[0].mxu0 %v1251
      %v1345 = vpop.f32.mrb[0].mxu0
      %v1346 = vadd.f32 0.0, %v1345
      %v1347 = vpop.f32.mrb[0].mxu0
      %v1348 = vpop.f32.mrb[0].mxu0
      %v1349 = vadd.f32 0.0, %v1348
      %v1350 = vpop.f32.mrb[0].mxu0
      %1351 = vmatprep.mubr.bf16.mxu0 0
      %1352 = vmatmul.mubr.bf16.gmra.mrb[0].mxu0 %v1254
      %v1353 = vpop.f32.mrb[0].mxu0
      %v1354 = vadd.f32 0.0, %v1353
      %v1355 = vpop.f32.mrb[0].mxu0
      %v1356 = vpop.f32.mrb[0].mxu0
      %v1357 = vadd.f32 0.0, %v1356
      %v1358 = vpop.f32.mrb[0].mxu0
      %1359 = vmatprep.mubr.bf16.mxu0 0
      %1360 = vmatmul.mubr.bf16.gmra.mrb[0].mxu0 %v1257
      %v1361 = vpop.f32.mrb[0].mxu0
      %v1362 = vadd.f32 0.0, %v1361
      %v1363 = vpop.f32.mrb[0].mxu0
      %v1364 = vpop.f32.mrb[0].mxu0
      %v1365 = vadd.f32 0.0, %v1364
      %v1366 = vpop.f32.mrb[0].mxu0
      %1367 = vmatprep.mubr.bf16.mxu0 0
      %1368 = vmatmul.mubr.bf16.gmra.mrb[0].mxu0 %v1260
      %v1369 = vpop.f32.mrb[0].mxu0
      %v1370 = vadd.f32 0.0, %v1369
      %v1371 = vpop.f32.mrb[0].mxu0
      %v1372 = vpop.f32.mrb[0].mxu0
      %v1373 = vadd.f32 0.0, %v1372
      %v1374 = vpop.f32.mrb[0].mxu0
      %1375 = vmatprep.mubr.bf16.mxu0 0
      %1376 = vmatmul.mubr.bf16.gmra.mrb[0].mxu0 %v1263
      %v1377 = vpop.f32.mrb[0].mxu0
      %v1378 = vadd.f32 0.0, %v1377
      %v1379 = vpop.f32.mrb[0].mxu0
      %v1380 = vpop.f32.mrb[0].mxu0
      %v1381 = vadd.f32 0.0, %v1380
      %v1382 = vpop.f32.mrb[0].mxu0
      %1383 = vmatprep.mubr.bf16.mxu0 0
      %1384 = vmatmul.mubr.bf16.gmra.mrb[0].mxu0 %v1266
      %v1385 = vpop.f32.mrb[0].mxu0
      %v1386 = vadd.f32 0.0, %v1385
      %v1387 = vpop.f32.mrb[0].mxu0
      %v1388 = vpop.f32.mrb[0].mxu0
      %v1389 = vadd.f32 0.0, %v1388
      %v1390 = vpop.f32.mrb[0].mxu0
      %1391 = vmatprep.mubr.bf16.mxu0 0
      %1392 = vmatmul.mubr.bf16.gmra.mrb[0].mxu0 %v1269
      %v1393 = vpop.f32.mrb[0].mxu0
      %v1394 = vadd.f32 0.0, %v1393
      %v1395 = vpop.f32.mrb[0].mxu0
      %v1396 = vpop.f32.mrb[0].mxu0
      %v1397 = vadd.f32 0.0, %v1396
      %v1398 = vpop.f32.mrb[0].mxu0
      %1399 = vdwg.mxu0
      %vm1400 = vcmask 130048
      %1401 = vst.msk [vmem:[%s302] sm:$0xff] %vm1400, %v1306
      %1402 = vst.msk [vmem:[%s302 + $0x8] sm:$0xff] %vm1400, %v1309
      %1403 = vst.msk [vmem:[%s302 + $0x10] sm:$0xff] %vm1400, %v1314
      %1404 = vst.msk [vmem:[%s302 + $0x18] sm:$0xff] %vm1400, %v1317
      %1405 = vst.msk [vmem:[%s302 + $0x20] sm:$0xff] %vm1400, %v1322
      %1406 = vst.msk [vmem:[%s302 + $0x28] sm:$0xff] %vm1400, %v1325
      %1407 = vst.msk [vmem:[%s302 + $0x30] sm:$0xff] %vm1400, %v1330
      %1408 = vst.msk [vmem:[%s302 + $0x38] sm:$0xff] %vm1400, %v1333
      %1409 = vst.msk [vmem:[%s302 + $0x40] sm:$0xff] %vm1400, %v1338
      %1410 = vst.msk [vmem:[%s302 + $0x48] sm:$0xff] %vm1400, %v1341
      %1411 = vst.msk [vmem:[%s302 + $0x50] sm:$0xff] %vm1400, %v1346
      %1412 = vst.msk [vmem:[%s302 + $0x58] sm:$0xff] %vm1400, %v1349
      %1413 = vst.msk [vmem:[%s302 + $0x60] sm:$0xff] %vm1400, %v1354
      %1414 = vst.msk [vmem:[%s302 + $0x68] sm:$0xff] %vm1400, %v1357
      %1415 = vst.msk [vmem:[%s302 + $0x70] sm:$0xff] %vm1400, %v1362
      %1416 = vst.msk [vmem:[%s302 + $0x78] sm:$0xff] %vm1400, %v1365
      %1417 = vst.msk [vmem:[%s302 + $0x80] sm:$0xff] %vm1400, %v1370
      %1418 = vst.msk [vmem:[%s302 + $0x88] sm:$0xff] %vm1400, %v1373
      %1419 = vst.msk [vmem:[%s302 + $0x90] sm:$0xff] %vm1400, %v1378
      %1420 = vst.msk [vmem:[%s302 + $0x98] sm:$0xff] %vm1400, %v1381
      %1421 = vst.msk [vmem:[%s302 + $0xa0] sm:$0xff] %vm1400, %v1386
      %1422 = vst.msk [vmem:[%s302 + $0xa8] sm:$0xff] %vm1400, %v1389
      %1423 = vst.msk [vmem:[%s302 + $0xb0] sm:$0xff] %vm1400, %v1394
      %1424 = vst.msk [vmem:[%s302 + $0xb8] sm:$0xff] %vm1400, %v1397
      %s1425 = smul.u32 24, %s18
      %p1426 = scmp.lt.s32.totalorder %s1425, 47
      %s1427 = scalar_select %p1426, %s1425, 47
      %s1428 = smul.addr %s1427, 8
      %s1429 = scalar_lea.vmem %s7, %s1428
      // Predicated region
      $region49: #{gated_mlp_concat.1} parent=47 // pred_check
        %p1430 = pneg %p193
      $region50: #{gated_mlp_concat.1} parent=47 // pred_check_branch
        %1432 = sbr.rel (%p1430) target = $region52
      $region51: #{gated_mlp_concat.1} parent=47 // pred_region
        %s1433 = smul.u32 24, %s18
      $region52: #{gated_mlp_concat.1} parent=47 // pred_fallthru
        _
    $region48: #{gated_mlp_concat.1} parent=5 // pred_fallthru
      _
    %p1434 = scmp.le.s32.totalorder 2, %s13
    // Predicated region
    $region53: #{gated_mlp_concat.1} parent=5 // pred_check
      %p1435 = pneg %p1434
    $region54: #{gated_mlp_concat.1} parent=5 // pred_check_branch
      %1437 = sbr.rel (%p1435) target = $region56
    $region55: #{gated_mlp_concat.1} parent=5 // pred_region
      %s1438 = ssub.s32 %s13, 2
      // Predicated region
      $region57: #{gated_mlp_concat.1} parent=55 // pred_check
        %p1439 = pneg %p199
      $region58: #{gated_mlp_concat.1} parent=55 // pred_check_branch
        %1441 = sbr.rel (%p1439) target = $region60
      $region59: #{gated_mlp_concat.1} parent=55 // pred_region
        %s1442 = smul.u32 24, %s19
        %p1443 = scmp.lt.s32.totalorder %s1442, 47
        %s1444 = scalar_select %p1443, %s1442, 47
        %s1445 = smul.addr %s1444, 8
        %s1446 = scalar_lea.vmem %s7, %s1445
      $region60: #{gated_mlp_concat.1} parent=55 // pred_fallthru
        _
    $region56: #{gated_mlp_concat.1} parent=5 // pred_fallthru
      _
  $region6: #{gated_mlp_concat.1} parent=0 // loop_footer
    %s17 = sadd.s32 1, %s13
  $region7: #{gated_mlp_concat.1} parent=0 // loop_footer_branch
    %12 = sbr.rel target = $region3
  $region8: #{gated_mlp_concat.1} parent=0 // loop_exit
    _

</llo_original>
